<compile_context>
chip_gen: v6e
topology: v6e:2x2x1
jax: 0.10.0
libtpu: 0.0.40
codegen_flags: <defaults>
</compile_context>

<pallas_src>
import functools

import jax
import jax.numpy as jnp
from jax.experimental import pallas as pl
from jax.experimental.pallas import tpu as pltpu


def _round_up(x, m):
    return (x + m - 1) // m * m


def _pick_row_tile(rows, target):
    """Largest divisor of `rows` that is a multiple of 8 and <= target, else rows."""
    for t in range(min(rows, target), 7, -1):
        if rows % t == 0 and t % 8 == 0:
            return t
    return rows


def _conv_stats_kernel(*refs, K):
    # refs: K im2col plane refs (tr, K*K*Cin), w_ref (K, K*K*Cin, Cout),
    #       o_ref (tr, Cout), stat_ref (2, Cout)
    planes = refs[:K]
    w_ref = refs[K]
    o_ref = refs[K + 1]
    stat_ref = refs[K + 2]

    # K chained MXU matmuls with 9*Cin contraction depth; accumulate in vregs
    # (no VMEM accumulator round trips; on v7x Mosaic can keep partials in the
    # MRB and accumulate in place).
    acc = jnp.dot(planes[0][...], w_ref[0], preferred_element_type=jnp.float32)
    for kz in range(1, K):
        acc = acc + jnp.dot(planes[kz][...], w_ref[kz],
                            preferred_element_type=jnp.float32)

    o_ref[...] = acc.astype(o_ref.dtype)
    # BatchNorm partial sums over this tile's (all-valid) voxels.
    stat_ref[0:1, :] = jnp.sum(acc, axis=0, keepdims=True)
    stat_ref[1:2, :] = jnp.sum(acc * acc, axis=0, keepdims=True)


def _bn_apply_kernel(y_ref, scale_ref, shift_ref, o_ref):
    o_ref[...] = y_ref[...] * scale_ref[...] + shift_ref[...]


def residual_path(x, w, gamma, beta, *, ks=3, stride=1, dilation=1, eps=1e-5,
                  compute_dtype=jnp.float32, row_tile_target=512,
                  bn_row_tile=2048):
    """x: (N,D,H,W,Cin); w: (ks^3, Cin, Cout); gamma/beta: (Cout,)."""
    if stride != 1 or dilation != 1:
        raise NotImplementedError("only stride=1, dilation=1 is implemented")

    N, D, H, W, Cin = x.shape
    K = ks
    Cout = w.shape[-1]
    pad = (K - 1) // 2
    HW = H * W
    CK = K * K * Cin

    # -------- wrapper-side im2col of the (ky, kx) taps per depth plane --------
    xc = x.astype(compute_dtype)
    xp = jnp.pad(xc, ((0, 0), (pad, pad), (pad, pad), (pad, pad), (0, 0)))
    Dp = D + 2 * pad
    cols = [xp[:, :, ky:ky + H, kx:kx + W, :]
            for ky in range(K) for kx in range(K)]
    x_im = jnp.concatenate(cols, axis=-1).reshape(N, Dp, HW, CK)

    # Weight folded to (kz, ky*kx*Cin, Cout) to match the im2col channel order.
    w2 = w.astype(compute_dtype).reshape(K, CK, Cout)

    tr = _pick_row_tile(HW, row_tile_target)   # spatial row tile (v7x VMEM budget)
    RT = HW // tr

    # ---------------- Pass 1: conv + per-tile BN partial stats ----------------
    def plane_spec(kz):
        return pl.BlockSpec((None, None, tr, CK),
                            lambda n, d, r, _kz=kz: (n, d + _kz, r, 0))

    kernel1 = functools.partial(_conv_stats_kernel, K=K)

    x_im_bytes = x_im.size * x_im.dtype.itemsize
    flops1 = 2 * N * D * HW * CK * Cout
    bytes1 = (K * x_im_bytes + w2.size * w2.dtype.itemsize
              + 4 * N * D * HW * Cout + 4 * N * D * RT * 2 * Cout)

    conv_out, stats = pl.pallas_call(
        kernel1,
        grid=(N, D, RT),
        in_specs=[plane_spec(kz) for kz in range(K)] + [
            pl.BlockSpec((K, CK, Cout), lambda n, d, r: (0, 0, 0)),
        ],
        out_specs=(
            pl.BlockSpec((None, None, tr, Cout), lambda n, d, r: (n, d, r, 0)),
            pl.BlockSpec((None, None, None, 2, Cout),
                         lambda n, d, r: (n, d, r, 0, 0)),
        ),
        out_shape=(
            jax.ShapeDtypeStruct((N, D, HW, Cout), jnp.float32),
            jax.ShapeDtypeStruct((N, D, RT, 2, Cout), jnp.float32),
        ),
        compiler_params=pltpu.CompilerParams(
            dimension_semantics=("parallel", "parallel", "parallel"),
            vmem_limit_bytes=64 * 1024 * 1024),
        cost_estimate=pl.CostEstimate(
            flops=flops1, transcendentals=0, bytes_accessed=bytes1),
    )(*([x_im] * K + [w2]))

    # ------------- Tiny reduction: batch stats -> per-channel affine ----------
    count = jnp.float32(N * D * H * W)
    s1 = jnp.sum(stats[:, :, :, 0, :], axis=(0, 1, 2))
    s2 = jnp.sum(stats[:, :, :, 1, :], axis=(0, 1, 2))
    mean = s1 / count
    var = jnp.maximum(s2 / count - mean * mean, 0.0)   # clamp vs. cancellation
    inv_std = jax.lax.rsqrt(var + eps)
    g = gamma.astype(jnp.float32)
    b = beta.astype(jnp.float32)
    scale = (g * inv_std).reshape(1, Cout)
    shift = (b - mean * g * inv_std).reshape(1, Cout)

    # ------------- Pass 2: large-tile, mem-bound BN affine apply --------------
    R = N * D * HW
    conv_flat = conv_out.reshape(R, Cout)          # free, row-major contiguous
    tr2 = min(bn_row_tile, _round_up(R, 8))
    grid2 = pl.cdiv(R, tr2)
    flops2 = 2 * R * Cout
    bytes2 = 4 * (2 * R * Cout + 2 * Cout)

    out_flat = pl.pallas_call(
        _bn_apply_kernel,
        grid=(grid2,),
        in_specs=[
            pl.BlockSpec((tr2, Cout), lambda i: (i, 0)),
            pl.BlockSpec((1, Cout), lambda i: (0, 0)),
            pl.BlockSpec((1, Cout), lambda i: (0, 0)),
        ],
        out_specs=pl.BlockSpec((tr2, Cout), lambda i: (i, 0)),
        out_shape=jax.ShapeDtypeStruct((R, Cout), jnp.float32),
        input_output_aliases={0: 0},               # reuse conv buffer for output
        compiler_params=pltpu.CompilerParams(
            dimension_semantics=("parallel",)),
        cost_estimate=pl.CostEstimate(
            flops=flops2, transcendentals=0, bytes_accessed=bytes2),
    )(conv_flat, scale, shift)

    return out_flat.reshape(N, D, H, W, Cout)


def _reference(x, w, gamma, beta, *, ks=3, eps=1e-5):
    """Pure-JAX reference: dense conv3d + train-mode BN (no activation)."""
    K = ks
    Cin = x.shape[-1]
    Cout = w.shape[-1]
    w_dhwio = w.reshape(K, K, K, Cin, Cout)
    y = jax.lax.conv_general_dilated(
        x, w_dhwio, window_strides=(1, 1, 1), padding="SAME",
        dimension_numbers=("NDHWC", "DHWIO", "NDHWC"))
    mean = jnp.mean(y, axis=(0, 1, 2, 3), keepdims=True)
    var = jnp.mean((y - mean) ** 2, axis=(0, 1, 2, 3), keepdims=True)
    return (y - mean) * jax.lax.rsqrt(var + eps) * gamma + beta


if __name__ == "__main__":
    key = jax.random.PRNGKey(0)
    k_x, k_w, k_g, k_b = jax.random.split(key, 4)

    N, D, H, W = 2, 8, 8, 8
    Cin, Cout, K = 4, 8, 3

    x = jax.random.normal(k_x, (N, D, H, W, Cin), dtype=jnp.float32)
    # spnn.Conv3d weight: (K^3, inc, outc), bias-free.
    w = 0.1 * jax.random.normal(k_w, (K * K * K, Cin, Cout), dtype=jnp.float32)
    # spnn.BatchNorm(outc) affine params.
    gamma = 1.0 + 0.1 * jax.random.normal(k_g, (Cout,), dtype=jnp.float32)
    beta = 0.1 * jax.random.normal(k_b, (Cout,), dtype=jnp.float32)

    fn = jax.jit(functools.partial(residual_path, ks=K))
    out = fn(x, w, gamma, beta)
    out = jax.block_until_ready(out)

    ref = _reference(x, w, gamma, beta, ks=K)
    assert out.shape == (N, D, H, W, Cout)
    err = float(jnp.max(jnp.abs(out - ref)))
    assert jnp.allclose(out, ref, atol=2e-4, rtol=2e-4), err

    print("KERNEL_OK")
</pallas_src>

<mosaic_0001>
module attributes {stable_mosaic.version = 11 : i64} {
  func.func @_conv_stats_kernel(%arg0: i32, %arg1: i32, %arg2: i32, %arg3: memref<1x1x64x36xf32, #tpu.memory_space<vmem>>, %arg4: memref<1x1x64x36xf32, #tpu.memory_space<vmem>>, %arg5: memref<1x1x64x36xf32, #tpu.memory_space<vmem>>, %arg6: memref<3x36x8xf32, #tpu.memory_space<vmem>>, %arg7: memref<1x1x64x8xf32, #tpu.memory_space<vmem>>, %arg8: memref<1x1x1x2x8xf32, #tpu.memory_space<vmem>>) attributes {dimension_semantics = [#tpu.dimension_semantics<parallel>, #tpu.dimension_semantics<parallel>, #tpu.dimension_semantics<parallel>], iteration_bounds = array<i64: 2, 8, 1>, scalar_prefetch = 0 : i64, scratch_operands = 0 : i64, tpu.core_type = #tpu.core_type<tc>, window_params = [{transform_indices = @transform_0, window_bounds = array<i64: 1, 1, 64, 36>}, {transform_indices = @transform_1, window_bounds = array<i64: 1, 1, 64, 36>}, {transform_indices = @transform_2, window_bounds = array<i64: 1, 1, 64, 36>}, {pipeline_mode = #tpu.pipeline_mode<synchronous>, transform_indices = @transform_3, window_bounds = array<i64: 3, 36, 8>}, {transform_indices = @transform_4, window_bounds = array<i64: 1, 1, 64, 8>}, {transform_indices = @transform_5, window_bounds = array<i64: 1, 1, 1, 2, 8>}]} {
    %c0 = arith.constant 0 : index
    %c0_0 = arith.constant 0 : index
    %c0_1 = arith.constant 0 : index
    %c0_2 = arith.constant 0 : index
    %0 = vector.load %arg3[%c0, %c0_0, %c0_1, %c0_2] : memref<1x1x64x36xf32, #tpu.memory_space<vmem>>, vector<1x1x64x36xf32>
    %1 = vector.shape_cast %0 : vector<1x1x64x36xf32> to vector<64x36xf32>
    %c0_3 = arith.constant 0 : index
    %c0_4 = arith.constant 0 : index
    %c0_5 = arith.constant 0 : index
    %2 = vector.load %arg6[%c0_3, %c0_4, %c0_5] : memref<3x36x8xf32, #tpu.memory_space<vmem>>, vector<1x36x8xf32>
    %3 = vector.shape_cast %2 : vector<1x36x8xf32> to vector<36x8xf32>
    %cst = arith.constant dense<0.000000e+00> : vector<64x8xf32>
    %4 = tpu.matmul %1, %3, %cst {dimension_numbers = #tpu.dot_dimension_numbers<[1], [0], [0], [1], [0, 0, 1, 1], [], []>} : vector<64x36xf32>, vector<36x8xf32>, vector<64x8xf32> -> vector<64x8xf32>
    %c0_6 = arith.constant 0 : index
    %c0_7 = arith.constant 0 : index
    %c0_8 = arith.constant 0 : index
    %c0_9 = arith.constant 0 : index
    %5 = vector.load %arg4[%c0_6, %c0_7, %c0_8, %c0_9] : memref<1x1x64x36xf32, #tpu.memory_space<vmem>>, vector<1x1x64x36xf32>
    %6 = vector.shape_cast %5 : vector<1x1x64x36xf32> to vector<64x36xf32>
    %c1 = arith.constant 1 : index
    %c0_10 = arith.constant 0 : index
    %c0_11 = arith.constant 0 : index
    %7 = vector.load %arg6[%c1, %c0_10, %c0_11] : memref<3x36x8xf32, #tpu.memory_space<vmem>>, vector<1x36x8xf32>
    %8 = vector.shape_cast %7 : vector<1x36x8xf32> to vector<36x8xf32>
    %cst_12 = arith.constant dense<0.000000e+00> : vector<64x8xf32>
    %9 = tpu.matmul %6, %8, %cst_12 {dimension_numbers = #tpu.dot_dimension_numbers<[1], [0], [0], [1], [0, 0, 1, 1], [], []>} : vector<64x36xf32>, vector<36x8xf32>, vector<64x8xf32> -> vector<64x8xf32>
    %10 = arith.addf %4, %9 : vector<64x8xf32>
    %c0_13 = arith.constant 0 : index
    %c0_14 = arith.constant 0 : index
    %c0_15 = arith.constant 0 : index
    %c0_16 = arith.constant 0 : index
    %11 = vector.load %arg5[%c0_13, %c0_14, %c0_15, %c0_16] : memref<1x1x64x36xf32, #tpu.memory_space<vmem>>, vector<1x1x64x36xf32>
    %12 = vector.shape_cast %11 : vector<1x1x64x36xf32> to vector<64x36xf32>
    %c2 = arith.constant 2 : index
    %c0_17 = arith.constant 0 : index
    %c0_18 = arith.constant 0 : index
    %13 = vector.load %arg6[%c2, %c0_17, %c0_18] : memref<3x36x8xf32, #tpu.memory_space<vmem>>, vector<1x36x8xf32>
    %14 = vector.shape_cast %13 : vector<1x36x8xf32> to vector<36x8xf32>
    %cst_19 = arith.constant dense<0.000000e+00> : vector<64x8xf32>
    %15 = tpu.matmul %12, %14, %cst_19 {dimension_numbers = #tpu.dot_dimension_numbers<[1], [0], [0], [1], [0, 0, 1, 1], [], []>} : vector<64x36xf32>, vector<36x8xf32>, vector<64x8xf32> -> vector<64x8xf32>
    %16 = arith.addf %10, %15 : vector<64x8xf32>
    %c0_20 = arith.constant 0 : index
    %c0_21 = arith.constant 0 : index
    %c0_22 = arith.constant 0 : index
    %c0_23 = arith.constant 0 : index
    %17 = vector.load %arg7[%c0_20, %c0_21, %c0_22, %c0_23] : memref<1x1x64x8xf32, #tpu.memory_space<vmem>>, vector<1x1x64x8xf32>
    %18 = vector.shape_cast %17 : vector<1x1x64x8xf32> to vector<64x8xf32>
    %19 = vector.shape_cast %16 : vector<64x8xf32> to vector<1x1x64x8xf32>
    tpu.vector_store %arg7[%c0_20, %c0_21, %c0_22, %c0_23], %19 {strides = array<i32>} : memref<1x1x64x8xf32, #tpu.memory_space<vmem>>, vector<1x1x64x8xf32>,
    %cst_24 = arith.constant dense<0.000000e+00> : vector<8xf32>
    %20 = vector.multi_reduction <add>, %16, %cst_24 [0] : vector<64x8xf32> to vector<8xf32>
    %21 = vector.shape_cast %20 : vector<8xf32> to vector<1x8xf32>
    %c0_25 = arith.constant 0 : index
    %c0_26 = arith.constant 0 : index
    %c0_27 = arith.constant 0 : index
    %c0_28 = arith.constant 0 : index
    %c0_29 = arith.constant 0 : index
    %22 = vector.load %arg8[%c0_25, %c0_26, %c0_27, %c0_28, %c0_29] : memref<1x1x1x2x8xf32, #tpu.memory_space<vmem>>, vector<1x1x1x1x8xf32>
    %23 = vector.shape_cast %22 : vector<1x1x1x1x8xf32> to vector<1x8xf32>
    %24 = vector.shape_cast %21 : vector<1x8xf32> to vector<1x1x1x1x8xf32>
    tpu.vector_store %arg8[%c0_25, %c0_26, %c0_27, %c0_28, %c0_29], %24 {strides = array<i32>} : memref<1x1x1x2x8xf32, #tpu.memory_space<vmem>>, vector<1x1x1x1x8xf32>,
    %25 = arith.mulf %16, %16 : vector<64x8xf32>
    %cst_30 = arith.constant dense<0.000000e+00> : vector<8xf32>
    %26 = vector.multi_reduction <add>, %25, %cst_30 [0] : vector<64x8xf32> to vector<8xf32>
    %27 = vector.shape_cast %26 : vector<8xf32> to vector<1x8xf32>
    %c0_31 = arith.constant 0 : index
    %c0_32 = arith.constant 0 : index
    %c0_33 = arith.constant 0 : index
    %c1_34 = arith.constant 1 : index
    %c0_35 = arith.constant 0 : index
    %28 = vector.load %arg8[%c0_31, %c0_32, %c0_33, %c1_34, %c0_35] : memref<1x1x1x2x8xf32, #tpu.memory_space<vmem>>, vector<1x1x1x1x8xf32>
    %29 = vector.shape_cast %28 : vector<1x1x1x1x8xf32> to vector<1x8xf32>
    %30 = vector.shape_cast %27 : vector<1x8xf32> to vector<1x1x1x1x8xf32>
    tpu.vector_store %arg8[%c0_31, %c0_32, %c0_33, %c1_34, %c0_35], %30 {strides = array<i32>} : memref<1x1x1x2x8xf32, #tpu.memory_space<vmem>>, vector<1x1x1x1x8xf32>,
    return
  }
  func.func @transform_0(%arg0: i32, %arg1: i32, %arg2: i32) -> (i32, i32, i32, i32) {
    %c0_i32 = arith.constant 0 : i32
    %0 = arith.addi %arg1, %c0_i32 : i32
    %c0_i32_0 = arith.constant 0 : i32
    %c0_i32_1 = arith.constant 0 : i32
    return %arg0, %0, %arg2, %c0_i32_0 : i32, i32, i32, i32
  }
  func.func @transform_1(%arg0: i32, %arg1: i32, %arg2: i32) -> (i32, i32, i32, i32) {
    %c1_i32 = arith.constant 1 : i32
    %0 = arith.addi %arg1, %c1_i32 : i32
    %c0_i32 = arith.constant 0 : i32
    %c0_i32_0 = arith.constant 0 : i32
    return %arg0, %0, %arg2, %c0_i32 : i32, i32, i32, i32
  }
  func.func @transform_2(%arg0: i32, %arg1: i32, %arg2: i32) -> (i32, i32, i32, i32) {
    %c2_i32 = arith.constant 2 : i32
    %0 = arith.addi %arg1, %c2_i32 : i32
    %c0_i32 = arith.constant 0 : i32
    %c0_i32_0 = arith.constant 0 : i32
    return %arg0, %0, %arg2, %c0_i32 : i32, i32, i32, i32
  }
  func.func @transform_3(%arg0: i32, %arg1: i32, %arg2: i32) -> (i32, i32, i32) {
    %c0_i32 = arith.constant 0 : i32
    %c0_i32_0 = arith.constant 0 : i32
    %c0_i32_1 = arith.constant 0 : i32
    %c0_i32_2 = arith.constant 0 : i32
    return %c0_i32, %c0_i32_0, %c0_i32_1 : i32, i32, i32
  }
  func.func @transform_4(%arg0: i32, %arg1: i32, %arg2: i32) -> (i32, i32, i32, i32) {
    %c0_i32 = arith.constant 0 : i32
    %c0_i32_0 = arith.constant 0 : i32
    return %arg0, %arg1, %arg2, %c0_i32 : i32, i32, i32, i32
  }
  func.func @transform_5(%arg0: i32, %arg1: i32, %arg2: i32) -> (i32, i32, i32, i32, i32) {
    %c0_i32 = arith.constant 0 : i32
    %c0_i32_0 = arith.constant 0 : i32
    %c0_i32_1 = arith.constant 0 : i32
    return %arg0, %arg1, %arg2, %c0_i32, %c0_i32_0 : i32, i32, i32, i32, i32
  }
}

module attributes {stable_mosaic.version = 11 : i64} {
  func.func @_bn_apply_kernel(%arg0: i32, %arg1: memref<1024x8xf32, #tpu.memory_space<vmem>>, %arg2: memref<1x8xf32, #tpu.memory_space<vmem>>, %arg3: memref<1x8xf32, #tpu.memory_space<vmem>>, %arg4: memref<1024x8xf32, #tpu.memory_space<vmem>>) attributes {dimension_semantics = [#tpu.dimension_semantics<parallel>], iteration_bounds = array<i64: 1>, scalar_prefetch = 0 : i64, scratch_operands = 0 : i64, tpu.core_type = #tpu.core_type<tc>, window_params = [{transform_indices = @transform_0, window_bounds = array<i64: 1024, 8>}, {pipeline_mode = #tpu.pipeline_mode<synchronous>, transform_indices = @transform_1, window_bounds = array<i64: 1, 8>}, {pipeline_mode = #tpu.pipeline_mode<synchronous>, transform_indices = @transform_2, window_bounds = array<i64: 1, 8>}, {transform_indices = @transform_3, window_bounds = array<i64: 1024, 8>}]} {
    %c0 = arith.constant 0 : index
    %c0_0 = arith.constant 0 : index
    %0 = vector.load %arg1[%c0, %c0_0] : memref<1024x8xf32, #tpu.memory_space<vmem>>, vector<1024x8xf32>
    %c0_1 = arith.constant 0 : index
    %c0_2 = arith.constant 0 : index
    %1 = vector.load %arg2[%c0_1, %c0_2] : memref<1x8xf32, #tpu.memory_space<vmem>>, vector<1x8xf32>
    %2 = vector.broadcast %1 : vector<1x8xf32> to vector<1024x8xf32>
    %3 = arith.mulf %0, %2 : vector<1024x8xf32>
    %c0_3 = arith.constant 0 : index
    %c0_4 = arith.constant 0 : index
    %4 = vector.load %arg3[%c0_3, %c0_4] : memref<1x8xf32, #tpu.memory_space<vmem>>, vector<1x8xf32>
    %5 = vector.broadcast %4 : vector<1x8xf32> to vector<1024x8xf32>
    %6 = arith.addf %3, %5 : vector<1024x8xf32>
    %c0_5 = arith.constant 0 : index
    %c0_6 = arith.constant 0 : index
    %7 = vector.load %arg4[%c0_5, %c0_6] : memref<1024x8xf32, #tpu.memory_space<vmem>>, vector<1024x8xf32>
    tpu.vector_store %arg4[%c0_5, %c0_6], %6 {strides = array<i32>} : memref<1024x8xf32, #tpu.memory_space<vmem>>, vector<1024x8xf32>,
    return
  }
  func.func @transform_0(%arg0: i32) -> (i32, i32) {
    %c0_i32 = arith.constant 0 : i32
    %c0_i32_0 = arith.constant 0 : i32
    return %arg0, %c0_i32 : i32, i32
  }
  func.func @transform_1(%arg0: i32) -> (i32, i32) {
    %c0_i32 = arith.constant 0 : i32
    %c0_i32_0 = arith.constant 0 : i32
    %c0_i32_1 = arith.constant 0 : i32
    return %c0_i32, %c0_i32_0 : i32, i32
  }
  func.func @transform_2(%arg0: i32) -> (i32, i32) {
    %c0_i32 = arith.constant 0 : i32
    %c0_i32_0 = arith.constant 0 : i32
    %c0_i32_1 = arith.constant 0 : i32
    return %c0_i32, %c0_i32_0 : i32, i32
  }
  func.func @transform_3(%arg0: i32) -> (i32, i32) {
    %c0_i32 = arith.constant 0 : i32
    %c0_i32_0 = arith.constant 0 : i32
    return %arg0, %c0_i32 : i32, i32
  }
}

</mosaic_0001>

<llo_original>
// kernel: residual_path.2
$region0: #{residual_path.2}
  #allocation0 [shape = 'u32[]', space=smem, size = 0x4, offset = 0x4, fixed_abs, tag = 'smem constant byte address 0x4 - core index']
  #allocation1 [shape = 'u32[144,128]{1,0:T(1,128)}', space=vmem, size = 0x12000, scoped, tag = 'internal scratch']
  %s0 = inlined_call_operand.vmem [shape: f32[2,10,64,36], index: 0, kind: input, shape index: {}, may-alias: {0,1,2}]
  %s1 = inlined_call_operand.vmem [shape: f32[2,10,64,36], index: 1, kind: input, shape index: {}, may-alias: {0,1,2}]
  %s2 = inlined_call_operand.vmem [shape: f32[2,10,64,36], index: 2, kind: input, shape index: {}, may-alias: {0,1,2}]
  %s3 = inlined_call_operand.vmem [shape: f32[3,36,8], index: 3, kind: input, shape index: {}]
  %s4 = inlined_call_operand.vmem [shape: f32[2,8,64,8], index: 4, kind: output, shape index: {0}]
  %s5 = inlined_call_operand.vmem [shape: f32[2,8,1,2,8], index: 5, kind: output, shape index: {1}]
  %6 = xla_tuple %s4, %s5
  %s7 = sld [smem:[#allocation0]]
  $region57: #{residual_path.2} parent=0
    _
  %s9 = ssub.s32 1, %s7
  %s10 = scalar_select 0, %s9, %s7
  loop: start=0, step=1, limit=18
  $region2: #{residual_path.2} parent=0 // loop_pre_header
    _
  $region3: #{residual_path.2} parent=0 // loop_header
    %s12 = sphi 0, %s16
    %p13 = scmp.ge.s32.totalorder %s12, 18
    %s19 = sphi 0, %s38
    %s20 = sphi 0, %s34
    %s21 = sphi 0, %s30
    %s22 = sphi 0, %s19
    %s23 = sphi 0, %s20
    %s24 = sphi 0, %s21
    %s25 = sphi 0, %s22
    %s26 = sphi 0, %s23
    %s27 = sphi 0, %s24
    %s45 = sphi 0, %s47
    %s48 = sphi 0, %s45
    %s49 = sphi 0, %s48
    %s65 = sphi 0, %s49
    %s77 = sphi 0, %s79
    %s80 = sphi 0, %s77
    %s81 = sphi 0, %s80
    %s97 = sphi 0, %s81
    %s109 = sphi 0, %s111
    %s112 = sphi 0, %s109
    %s113 = sphi 0, %s112
    %s129 = sphi 0, %s113
    %s133 = sphi 0, %s133
    %s135 = sphi 0, %s133
    %s136 = sphi 0, %s135
    %s150 = sphi 0, %s136
    %s160 = sphi 0, %s162
    %s163 = sphi 0, %s160
    %s164 = sphi 0, %s163
    %s180 = sphi 0, %s164
    %s190 = sphi 0, %s192
    %s193 = sphi 0, %s190
    %s194 = sphi 0, %s193
    %s210 = sphi 0, %s194
  $region4: #{residual_path.2} parent=0 // loop_header_branch
    %15 = sbr.rel (%p13) target = $region8
  $region5: #{residual_path.2} parent=0 // loop_body
    %s17 = ssub.s32 %s12, 1
    %s18 = ssub.s32 %s12, 2
    %s28 = sadd.s32 1, %s21
    %p29 = scmp.ge.s32.totalorder %s28, 1
    %s30 = scalar_select %p29, 0, %s28
    %s31 = sadd.s32 1, %s20
    %s32 = scalar_select %p29, %s31, %s20
    %p33 = scmp.ge.s32.totalorder %s32, 8
    %s34 = scalar_select %p33, 0, %s32
    %s35 = sadd.s32 1, %s19
    %s36 = scalar_select %p33, %s35, %s19
    %p37 = scmp.ge.s32.totalorder %s36, 2
    %s38 = scalar_select %p37, 0, %s36
    %s39 = ssub.s32 %s19, %s38
    %s40 = ssub.s32 %s20, %s34
    %s41 = sor.u32 %s39, %s40
    %s42 = ssub.s32 %s21, %s30
    %s43 = sor.u32 %s41, %s42
    %p44 = scmp.eq.s32.totalorder %s43, 0
    %s46 = sadd.s32 %s45, 1
    %s47 = scalar_select %p44, %s45, %s46
    %p50 = pneg %p44
    %p51 = scmp.eq.s32.totalorder %s12, 15
    %p52 = por %p50, %p51
    %p53 = scmp.ne.s32.totalorder %s45, %s48
    %p54 = scmp.eq.s32.totalorder %s12, 0
    %p55 = por %p53, %p54
    %p56 = scmp.ne.s32.totalorder %s45, %s48
    %p57 = scmp.eq.s32.totalorder %s17, 15
    %p58 = por %p56, %p57
    %p59 = scmp.ne.s32.totalorder %s48, %s49
    %p60 = scmp.eq.s32.totalorder %s17, 0
    %p61 = por %p59, %p60
    %p62 = scmp.ne.s32.totalorder %s48, %s49
    %p63 = scmp.eq.s32.totalorder %s18, 15
    %p64 = por %p62, %p63
    %p66 = scmp.ne.s32.totalorder %s49, %s65
    %p67 = scmp.eq.s32.totalorder %s18, 0
    %p68 = por %p66, %p67
    %s69 = sadd.s32 %s20, 1
    %s70 = sadd.s32 %s34, 1
    %s71 = ssub.s32 %s19, %s38
    %s72 = ssub.s32 %s69, %s70
    %s73 = sor.u32 %s71, %s72
    %s74 = ssub.s32 %s21, %s30
    %s75 = sor.u32 %s73, %s74
    %p76 = scmp.eq.s32.totalorder %s75, 0
    %s78 = sadd.s32 %s77, 1
    %s79 = scalar_select %p76, %s77, %s78
    %p82 = pneg %p76
    %p83 = scmp.eq.s32.totalorder %s12, 15
    %p84 = por %p82, %p83
    %p85 = scmp.ne.s32.totalorder %s77, %s80
    %p86 = scmp.eq.s32.totalorder %s12, 0
    %p87 = por %p85, %p86
    %p88 = scmp.ne.s32.totalorder %s77, %s80
    %p89 = scmp.eq.s32.totalorder %s17, 15
    %p90 = por %p88, %p89
    %p91 = scmp.ne.s32.totalorder %s80, %s81
    %p92 = scmp.eq.s32.totalorder %s17, 0
    %p93 = por %p91, %p92
    %p94 = scmp.ne.s32.totalorder %s80, %s81
    %p95 = scmp.eq.s32.totalorder %s18, 15
    %p96 = por %p94, %p95
    %p98 = scmp.ne.s32.totalorder %s81, %s97
    %p99 = scmp.eq.s32.totalorder %s18, 0
    %p100 = por %p98, %p99
    %s101 = sadd.s32 %s20, 2
    %s102 = sadd.s32 %s34, 2
    %s103 = ssub.s32 %s19, %s38
    %s104 = ssub.s32 %s101, %s102
    %s105 = sor.u32 %s103, %s104
    %s106 = ssub.s32 %s21, %s30
    %s107 = sor.u32 %s105, %s106
    %p108 = scmp.eq.s32.totalorder %s107, 0
    %s110 = sadd.s32 %s109, 1
    %s111 = scalar_select %p108, %s109, %s110
    %p114 = pneg %p108
    %p115 = scmp.eq.s32.totalorder %s12, 15
    %p116 = por %p114, %p115
    %p117 = scmp.ne.s32.totalorder %s109, %s112
    %p118 = scmp.eq.s32.totalorder %s12, 0
    %p119 = por %p117, %p118
    %p120 = scmp.ne.s32.totalorder %s109, %s112
    %p121 = scmp.eq.s32.totalorder %s17, 15
    %p122 = por %p120, %p121
    %p123 = scmp.ne.s32.totalorder %s112, %s113
    %p124 = scmp.eq.s32.totalorder %s17, 0
    %p125 = por %p123, %p124
    %p126 = scmp.ne.s32.totalorder %s112, %s113
    %p127 = scmp.eq.s32.totalorder %s18, 15
    %p128 = por %p126, %p127
    %p130 = scmp.ne.s32.totalorder %s113, %s129
    %p131 = scmp.eq.s32.totalorder %s18, 0
    %p132 = por %p130, %p131
    %s134 = sadd.s32 %s133, 1
    %p137 = scmp.eq.s32.totalorder %s12, 15
    %p138 = scmp.ne.s32.totalorder %s133, %s135
    %p139 = scmp.eq.s32.totalorder %s12, 0
    %p140 = por %p138, %p139
    %p141 = scmp.ne.s32.totalorder %s133, %s135
    %p142 = scmp.eq.s32.totalorder %s17, 15
    %p143 = por %p141, %p142
    %p144 = scmp.ne.s32.totalorder %s135, %s136
    %p145 = scmp.eq.s32.totalorder %s17, 0
    %p146 = por %p144, %p145
    %p147 = scmp.ne.s32.totalorder %s135, %s136
    %p148 = scmp.eq.s32.totalorder %s18, 15
    %p149 = por %p147, %p148
    %p151 = scmp.ne.s32.totalorder %s136, %s150
    %p152 = scmp.eq.s32.totalorder %s18, 0
    %p153 = por %p151, %p152
    %s154 = ssub.s32 %s19, %s38
    %s155 = ssub.s32 %s20, %s34
    %s156 = sor.u32 %s154, %s155
    %s157 = ssub.s32 %s21, %s30
    %s158 = sor.u32 %s156, %s157
    %p159 = scmp.eq.s32.totalorder %s158, 0
    %s161 = sadd.s32 %s160, 1
    %s162 = scalar_select %p159, %s160, %s161
    %p165 = pneg %p159
    %p166 = scmp.eq.s32.totalorder %s12, 15
    %p167 = por %p165, %p166
    %p168 = scmp.ne.s32.totalorder %s160, %s163
    %p169 = scmp.eq.s32.totalorder %s12, 0
    %p170 = por %p168, %p169
    %p171 = scmp.ne.s32.totalorder %s160, %s163
    %p172 = scmp.eq.s32.totalorder %s17, 15
    %p173 = por %p171, %p172
    %p174 = scmp.ne.s32.totalorder %s163, %s164
    %p175 = scmp.eq.s32.totalorder %s17, 0
    %p176 = por %p174, %p175
    %p177 = scmp.ne.s32.totalorder %s163, %s164
    %p178 = scmp.eq.s32.totalorder %s18, 15
    %p179 = por %p177, %p178
    %p181 = scmp.ne.s32.totalorder %s164, %s180
    %p182 = scmp.eq.s32.totalorder %s18, 0
    %p183 = por %p181, %p182
    %s184 = ssub.s32 %s19, %s38
    %s185 = ssub.s32 %s20, %s34
    %s186 = sor.u32 %s184, %s185
    %s187 = ssub.s32 %s21, %s30
    %s188 = sor.u32 %s186, %s187
    %p189 = scmp.eq.s32.totalorder %s188, 0
    %s191 = sadd.s32 %s190, 1
    %s192 = scalar_select %p189, %s190, %s191
    %p195 = pneg %p189
    %p196 = scmp.eq.s32.totalorder %s12, 15
    %p197 = por %p195, %p196
    %p198 = scmp.ne.s32.totalorder %s190, %s193
    %p199 = scmp.eq.s32.totalorder %s12, 0
    %p200 = por %p198, %p199
    %p201 = scmp.ne.s32.totalorder %s190, %s193
    %p202 = scmp.eq.s32.totalorder %s17, 15
    %p203 = por %p201, %p202
    %p204 = scmp.ne.s32.totalorder %s193, %s194
    %p205 = scmp.eq.s32.totalorder %s17, 0
    %p206 = por %p204, %p205
    %p207 = scmp.ne.s32.totalorder %s193, %s194
    %p208 = scmp.eq.s32.totalorder %s18, 15
    %p209 = por %p207, %p208
    %p211 = scmp.ne.s32.totalorder %s194, %s210
    %p212 = scmp.eq.s32.totalorder %s18, 0
    %p213 = por %p211, %p212
    %p214 = scmp.le.s32.totalorder 1, %s12
    %p215 = scmp.lt.s32.totalorder %s12, 17
    %p216 = pnand %p214, %p215
    %p217 = pneg %p216
    // Predicated region
    $region9: #{residual_path.2} parent=5 // pred_check
      _
    $region10: #{residual_path.2} parent=5 // pred_check_branch
      %219 = sbr.rel (%p216) target = $region12
    $region11: #{residual_path.2} parent=5 // pred_region
      %s220 = ssub.s32 %s12, 1
      // Predicated region
      $region13: #{residual_path.2} parent=11 // pred_check
        %p221 = pneg %p146
      $region14: #{residual_path.2} parent=11 // pred_check_branch
        %223 = sbr.rel (%p221) target = $region16
      $region15: #{residual_path.2} parent=11 // pred_region
        _
      $region16: #{residual_path.2} parent=11 // pred_fallthru
        _
    $region12: #{residual_path.2} parent=5 // pred_fallthru
      _
    %p224 = scmp.lt.s32.totalorder %s12, 16
    // Predicated region
    $region17: #{residual_path.2} parent=5 // pred_check
      %p225 = pneg %p224
    $region18: #{residual_path.2} parent=5 // pred_check_branch
      %227 = sbr.rel (%p225) target = $region20
    $region19: #{residual_path.2} parent=5 // pred_region
      // Predicated region
      $region21: #{residual_path.2} parent=19 // pred_check
        %p228 = pneg %p55
      $region22: #{residual_path.2} parent=19 // pred_check_branch
        %230 = sbr.rel (%p228) target = $region24
      $region23: #{residual_path.2} parent=19 // pred_region
        %s231 = smul.u32 8, %s21
        %p232 = scmp.lt.s32.totalorder %s19, 1
        %s233 = scalar_select %p232, %s19, 1
        %p234 = scmp.lt.s32.totalorder %s20, 9
        %s235 = scalar_select %p234, %s20, 9
        %p236 = scmp.lt.s32.totalorder %s231, 7
        %s237 = scalar_select %p236, %s231, 7
        %s238 = smul.addr %s235, 8
        %s239 = sadd.s32 %s237, %s238
        %s240 = smul.addr %s233, 80
        %s241 = sadd.s32 %s239, %s240
        %s242 = smul.addr %s241, 8
        %s243 = scalar_lea.vmem %s0, %s242
        %s244 = smul.u32 8, %s21
      $region24: #{residual_path.2} parent=19 // pred_fallthru
        _
      // Predicated region
      $region25: #{residual_path.2} parent=19 // pred_check
        %p245 = pneg %p87
      $region26: #{residual_path.2} parent=19 // pred_check_branch
        %247 = sbr.rel (%p245) target = $region28
      $region27: #{residual_path.2} parent=19 // pred_region
        %s248 = sadd.s32 %s20, 1
        %s249 = smul.u32 8, %s21
        %p250 = scmp.lt.s32.totalorder %s19, 1
        %s251 = scalar_select %p250, %s19, 1
        %p252 = scmp.lt.s32.totalorder %s248, 9
        %s253 = scalar_select %p252, %s248, 9
        %p254 = scmp.lt.s32.totalorder %s249, 7
        %s255 = scalar_select %p254, %s249, 7
        %s256 = smul.addr %s253, 8
        %s257 = sadd.s32 %s255, %s256
        %s258 = smul.addr %s251, 80
        %s259 = sadd.s32 %s257, %s258
        %s260 = smul.addr %s259, 8
        %s261 = scalar_lea.vmem %s1, %s260
        %s262 = sadd.s32 %s20, 1
        %s263 = smul.u32 8, %s21
      $region28: #{residual_path.2} parent=19 // pred_fallthru
        _
      // Predicated region
      $region29: #{residual_path.2} parent=19 // pred_check
        %p264 = pneg %p119
      $region30: #{residual_path.2} parent=19 // pred_check_branch
        %266 = sbr.rel (%p264) target = $region32
      $region31: #{residual_path.2} parent=19 // pred_region
        %s267 = sadd.s32 %s20, 2
        %s268 = smul.u32 8, %s21
        %p269 = scmp.lt.s32.totalorder %s19, 1
        %s270 = scalar_select %p269, %s19, 1
        %p271 = scmp.lt.s32.totalorder %s267, 9
        %s272 = scalar_select %p271, %s267, 9
        %p273 = scmp.lt.s32.totalorder %s268, 7
        %s274 = scalar_select %p273, %s268, 7
        %s275 = smul.addr %s272, 8
        %s276 = sadd.s32 %s274, %s275
        %s277 = smul.addr %s270, 80
        %s278 = sadd.s32 %s276, %s277
        %s279 = smul.addr %s278, 8
        %s280 = scalar_lea.vmem %s2, %s279
        %s281 = sadd.s32 %s20, 2
        %s282 = smul.u32 8, %s21
      $region32: #{residual_path.2} parent=19 // pred_fallthru
        _
    $region20: #{residual_path.2} parent=5 // pred_fallthru
      _
    %p283 = scmp.le.s32.totalorder 1, %s12
    %p284 = scmp.lt.s32.totalorder %s12, 17
    %p285 = pnand %p283, %p284
    %p286 = pneg %p285
    // Predicated region
    $region33: #{residual_path.2} parent=5 // pred_check
      _
    $region34: #{residual_path.2} parent=5 // pred_check_branch
      %288 = sbr.rel (%p285) target = $region36
    $region35: #{residual_path.2} parent=5 // pred_region
      %s289 = ssub.s32 %s12, 1
      %s290 = smul.u32 8, %s24
      %p291 = scmp.lt.s32.totalorder %s22, 1
      %s292 = scalar_select %p291, %s22, 1
      %p293 = scmp.lt.s32.totalorder %s23, 9
      %s294 = scalar_select %p293, %s23, 9
      %p295 = scmp.lt.s32.totalorder %s290, 7
      %s296 = scalar_select %p295, %s290, 7
      %s297 = smul.addr %s294, 8
      %s298 = sadd.s32 %s296, %s297
      %s299 = smul.addr %s292, 80
      %s300 = sadd.s32 %s298, %s299
      %s301 = smul.addr %s300, 8
      %s302 = scalar_lea.vmem %s0, %s301
      %p303 = pneg %p61
      %p304 = pneg %p58
      %s305 = sadd.s32 %s23, 1
      %s306 = smul.u32 8, %s24
      %p307 = scmp.lt.s32.totalorder %s22, 1
      %s308 = scalar_select %p307, %s22, 1
      %p309 = scmp.lt.s32.totalorder %s305, 9
      %s310 = scalar_select %p309, %s305, 9
      %p311 = scmp.lt.s32.totalorder %s306, 7
      %s312 = scalar_select %p311, %s306, 7
      %s313 = smul.addr %s310, 8
      %s314 = sadd.s32 %s312, %s313
      %s315 = smul.addr %s308, 80
      %s316 = sadd.s32 %s314, %s315
      %s317 = smul.addr %s316, 8
      %s318 = scalar_lea.vmem %s1, %s317
      %p319 = pneg %p93
      %p320 = pneg %p90
      %s321 = sadd.s32 %s23, 2
      %s322 = smul.u32 8, %s24
      %p323 = scmp.lt.s32.totalorder %s22, 1
      %s324 = scalar_select %p323, %s22, 1
      %p325 = scmp.lt.s32.totalorder %s321, 9
      %s326 = scalar_select %p325, %s321, 9
      %p327 = scmp.lt.s32.totalorder %s322, 7
      %s328 = scalar_select %p327, %s322, 7
      %s329 = smul.addr %s326, 8
      %s330 = sadd.s32 %s328, %s329
      %s331 = smul.addr %s324, 80
      %s332 = sadd.s32 %s330, %s331
      %s333 = smul.addr %s332, 8
      %s334 = scalar_lea.vmem %s2, %s333
      %p335 = pneg %p125
      %p336 = pneg %p122
      %p337 = pneg %p146
      %p338 = pneg %p143
      %p339 = pneg %p176
      %p340 = pneg %p173
      %s341 = smul.u32 8, %s24
      %p342 = scmp.lt.s32.totalorder %s22, 1
      %s343 = scalar_select %p342, %s22, 1
      %p344 = scmp.lt.s32.totalorder %s23, 7
      %s345 = scalar_select %p344, %s23, 7
      %p346 = scmp.lt.s32.totalorder %s341, 7
      %s347 = scalar_select %p346, %s341, 7
      %s348 = smul.addr %s345, 8
      %s349 = sadd.s32 %s347, %s348
      %s350 = smul.addr %s343, 64
      %s351 = sadd.s32 %s349, %s350
      %s352 = smul.addr %s351, 8
      %s353 = scalar_lea.vmem %s4, %s352
      %p354 = pneg %p206
      %p355 = pneg %p203
      %p356 = scmp.lt.s32.totalorder %s22, 1
      %s357 = scalar_select %p356, %s22, 1
      %p358 = scmp.lt.s32.totalorder %s23, 7
      %s359 = scalar_select %p358, %s23, 7
      %p360 = scmp.lt.s32.totalorder %s24, 0
      %s361 = scalar_select %p360, %s24, 0
      %s362 = sadd.s32 %s361, %s359
      %s363 = smul.addr %s357, 8
      %s364 = sadd.s32 %s362, %s363
      %s365 = smul.addr %s364, 2
      %s366 = scalar_lea.vmem %s5, %s365
      %s367 = smul.u32 8, %s24
      %p368 = scmp.lt.s32.totalorder %s22, 1
      %s369 = scalar_select %p368, %s22, 1
      %p370 = scmp.lt.s32.totalorder %s23, 9
      %s371 = scalar_select %p370, %s23, 9
      %p372 = scmp.lt.s32.totalorder %s367, 7
      %s373 = scalar_select %p372, %s367, 7
      %s374 = smul.addr %s371, 8
      %s375 = sadd.s32 %s373, %s374
      %s376 = smul.addr %s369, 80
      %s377 = sadd.s32 %s375, %s376
      %s378 = smul.addr %s377, 8
      %s379 = scalar_lea.vmem %s0, %s378
      %s380 = smul.u32 8, %s24
      %s381 = sadd.s32 %s23, 1
      %s382 = smul.u32 8, %s24
      %p383 = scmp.lt.s32.totalorder %s22, 1
      %s384 = scalar_select %p383, %s22, 1
      %p385 = scmp.lt.s32.totalorder %s381, 9
      %s386 = scalar_select %p385, %s381, 9
      %p387 = scmp.lt.s32.totalorder %s382, 7
      %s388 = scalar_select %p387, %s382, 7
      %s389 = smul.addr %s386, 8
      %s390 = sadd.s32 %s388, %s389
      %s391 = smul.addr %s384, 80
      %s392 = sadd.s32 %s390, %s391
      %s393 = smul.addr %s392, 8
      %s394 = scalar_lea.vmem %s1, %s393
      %s395 = sadd.s32 %s23, 1
      %s396 = smul.u32 8, %s24
      %s397 = sadd.s32 %s23, 2
      %s398 = smul.u32 8, %s24
      %p399 = scmp.lt.s32.totalorder %s22, 1
      %s400 = scalar_select %p399, %s22, 1
      %p401 = scmp.lt.s32.totalorder %s397, 9
      %s402 = scalar_select %p401, %s397, 9
      %p403 = scmp.lt.s32.totalorder %s398, 7
      %s404 = scalar_select %p403, %s398, 7
      %s405 = smul.addr %s402, 8
      %s406 = sadd.s32 %s404, %s405
      %s407 = smul.addr %s400, 80
      %s408 = sadd.s32 %s406, %s407
      %s409 = smul.addr %s408, 8
      %s410 = scalar_lea.vmem %s2, %s409
      %s411 = sadd.s32 %s23, 2
      %s412 = smul.u32 8, %s24
      %s413 = smul.u32 8, %s24
      %p414 = scmp.lt.s32.totalorder %s22, 1
      %s415 = scalar_select %p414, %s22, 1
      %p416 = scmp.lt.s32.totalorder %s23, 7
      %s417 = scalar_select %p416, %s23, 7
      %p418 = scmp.lt.s32.totalorder %s413, 7
      %s419 = scalar_select %p418, %s413, 7
      %s420 = smul.addr %s417, 8
      %s421 = sadd.s32 %s419, %s420
      %s422 = smul.addr %s415, 64
      %s423 = sadd.s32 %s421, %s422
      %s424 = smul.addr %s423, 8
      %s425 = scalar_lea.vmem %s4, %s424
      %s426 = smul.u32 8, %s24
      %p427 = scmp.lt.s32.totalorder %s22, 1
      %s428 = scalar_select %p427, %s22, 1
      %p429 = scmp.lt.s32.totalorder %s23, 7
      %s430 = scalar_select %p429, %s23, 7
      %p431 = scmp.lt.s32.totalorder %s24, 0
      %s432 = scalar_select %p431, %s24, 0
      %s433 = sadd.s32 %s432, %s430
      %s434 = smul.addr %s428, 8
      %s435 = sadd.s32 %s433, %s434
      %s436 = smul.addr %s435, 2
      %s437 = scalar_lea.vmem %s5, %s436
      %v438 = vld [vmem:[%s379] sm:$0xff]
      %v439 = vld [vmem:[%s379 + $0x8] sm:$0xff]
      %v440 = vld [vmem:[%s379 + $0x10] sm:$0xff]
      %v441 = vld [vmem:[%s379 + $0x18] sm:$0xff]
      %v442 = vld [vmem:[%s379 + $0x20] sm:$0xff]
      %v443 = vld [vmem:[%s379 + $0x28] sm:$0xff]
      %v444 = vld [vmem:[%s379 + $0x30] sm:$0xff]
      %v445 = vld [vmem:[%s379 + $0x38] sm:$0xff]
      %v446 = vld [vmem:[%s3] sm:$0xff]
      %v447 = vld [vmem:[%s3 + $0x8] sm:$0xff]
      %v448 = vld [vmem:[%s3 + $0x10] sm:$0xff]
      %v449 = vld [vmem:[%s3 + $0x18] sm:$0xff]
      %v450 = vld [vmem:[%s3 + $0x20] sm:$0xf]
      %v451 = vld [vmem:[%s394] sm:$0xff]
      %v452 = vld [vmem:[%s394 + $0x8] sm:$0xff]
      %v453 = vld [vmem:[%s394 + $0x10] sm:$0xff]
      %v454 = vld [vmem:[%s394 + $0x18] sm:$0xff]
      %v455 = vld [vmem:[%s394 + $0x20] sm:$0xff]
      %v456 = vld [vmem:[%s394 + $0x28] sm:$0xff]
      %v457 = vld [vmem:[%s394 + $0x30] sm:$0xff]
      %v458 = vld [vmem:[%s394 + $0x38] sm:$0xff]
      %s459 = scalar_lea.vmem %s3, 40
      %v460 = vld [vmem:[%s459] sm:$0xff]
      %v461 = vld [vmem:[%s459 + $0x8] sm:$0xff]
      %v462 = vld [vmem:[%s459 + $0x10] sm:$0xff]
      %v463 = vld [vmem:[%s459 + $0x18] sm:$0xff]
      %v464 = vld [vmem:[%s459 + $0x20] sm:$0xf]
      %vm465 = vcmask 293888
      %v467 = vsel %vm465, %v451, 0
      %v470 = vsel %vm465, %v452, 0
      %v473 = vsel %vm465, %v453, 0
      %v476 = vsel %vm465, %v454, 0
      %v479 = vsel %vm465, %v455, 0
      %v482 = vsel %vm465, %v456, 0
      %v485 = vsel %vm465, %v457, 0
      %v488 = vsel %vm465, %v458, 0
      %vm490 = vcmask 1043456
      %v492 = vsel %vm490, %v464, 0
      %494 = vmatprep.subr.mxu0 0.0
      %495 = vmatpush1.msra.mxu0 0.0
      %496 = vmatprep.subr.mxu0 0.0
      %497 = vmatpush1.msra.mxu0 0.0
      %498 = vmatprep.subr.mxu0 0.0
      %499 = vmatpush1.msra.mxu0 0.0
      %500 = vmatprep.subr.mxu0 0.0
      %501 = vmatpush1.msra.mxu0 0.0
      %502 = vmatprep.subr.mxu0 0.0
      %503 = vmatpush1.msra.mxu0 0.0
      %504 = vmatprep.subr.mxu0 0.0
      %505 = vmatpush1.msra.mxu0 0.0
      %506 = vmatprep.subr.mxu0 0.0
      %507 = vmatpush1.msra.mxu0 0.0
      %508 = vmatprep.subr.mxu0 0.0
      %509 = vmatpush1.msra.mxu0 0.0
      %510 = vmatprep.subr.mxu0 0.0
      %511 = vmatpush1.msra.mxu0 0.0
      %512 = vmatprep.subr.mxu0 0.0
      %513 = vmatpush1.msra.mxu0 0.0
      %514 = vmatprep.subr.mxu0 0.0
      %515 = vmatpush1.msra.mxu0 0.0
      %516 = vmatprep.subr.mxu0 0.0
      %517 = vmatpush1.msra.mxu0 %v492
      %518 = vmatprep.subr.mxu0 0.0
      %519 = vmatpush1.msra.mxu0 %v463
      %520 = vmatprep.subr.mxu0 0.0
      %521 = vmatpush1.msra.mxu0 %v462
      %522 = vmatprep.subr.mxu0 0.0
      %523 = vmatpush1.msra.mxu0 %v461
      %524 = vmatprep.subr.mxu0 0.0
      %525 = vmatpush1.msra.mxu0 %v460
      %526 = vmatprep.subr.mxu0 0.0
      %527 = vmatpush2.msra.mxu0 0.0
      %528 = vmatprep.subr.mxu0 0.0
      %529 = vmatpush2.msra.mxu0 0.0
      %530 = vmatprep.subr.mxu0 0.0
      %531 = vmatpush2.msra.mxu0 0.0
      %532 = vmatprep.subr.mxu0 0.0
      %533 = vmatpush2.msra.mxu0 0.0
      %534 = vmatprep.subr.mxu0 0.0
      %535 = vmatpush2.msra.mxu0 0.0
      %536 = vmatprep.subr.mxu0 0.0
      %537 = vmatpush2.msra.mxu0 0.0
      %538 = vmatprep.subr.mxu0 0.0
      %539 = vmatpush2.msra.mxu0 0.0
      %540 = vmatprep.subr.mxu0 0.0
      %541 = vmatpush2.msra.mxu0 0.0
      %542 = vmatprep.subr.mxu0 0.0
      %543 = vmatpush2.msra.mxu0 0.0
      %544 = vmatprep.subr.mxu0 0.0
      %545 = vmatpush2.msra.mxu0 0.0
      %546 = vmatprep.subr.mxu0 0.0
      %547 = vmatpush2.msra.mxu0 0.0
      %548 = vmatprep.subr.mxu0 0.0
      %549 = vmatpush2.msra.mxu0 0.0
      %550 = vmatprep.subr.mxu0 0.0
      %551 = vmatpush2.msra.mxu0 0.0
      %552 = vmatprep.subr.mxu0 0.0
      %553 = vmatpush2.msra.mxu0 0.0
      %554 = vmatprep.subr.mxu0 0.0
      %555 = vmatpush2.msra.mxu0 0.0
      %556 = vmatprep.subr.mxu0 0.0
      %557 = vmatpush2.msra.mxu0 0.0
      %558 = vmatprep.mubr.f32.mxu0 0.0
      %559 = vmatmul.mubr.f32.gmra.mxu0 %v467
      %v560 = vpop.f32.mrf.mxu0
      %v561 = vadd.f32 0.0, %v560
      %v562 = vpop.f32.mrf.mxu0
      %563 = vmatprep.mubr.f32.mxu0 0.0
      %564 = vmatmul.mubr.f32.gmra.mxu0 %v470
      %v565 = vpop.f32.mrf.mxu0
      %v566 = vadd.f32 0.0, %v565
      %v567 = vpop.f32.mrf.mxu0
      %568 = vmatprep.mubr.f32.mxu0 0.0
      %569 = vmatmul.mubr.f32.gmra.mxu0 %v473
      %v570 = vpop.f32.mrf.mxu0
      %v571 = vadd.f32 0.0, %v570
      %v572 = vpop.f32.mrf.mxu0
      %573 = vmatprep.mubr.f32.mxu0 0.0
      %574 = vmatmul.mubr.f32.gmra.mxu0 %v476
      %v575 = vpop.f32.mrf.mxu0
      %v576 = vadd.f32 0.0, %v575
      %v577 = vpop.f32.mrf.mxu0
      %578 = vmatprep.mubr.f32.mxu0 0.0
      %579 = vmatmul.mubr.f32.gmra.mxu0 %v479
      %v580 = vpop.f32.mrf.mxu0
      %v581 = vadd.f32 0.0, %v580
      %v582 = vpop.f32.mrf.mxu0
      %583 = vmatprep.mubr.f32.mxu0 0.0
      %584 = vmatmul.mubr.f32.gmra.mxu0 %v482
      %v585 = vpop.f32.mrf.mxu0
      %v586 = vadd.f32 0.0, %v585
      %v587 = vpop.f32.mrf.mxu0
      %588 = vmatprep.mubr.f32.mxu0 0.0
      %589 = vmatmul.mubr.f32.gmra.mxu0 %v485
      %v590 = vpop.f32.mrf.mxu0
      %v591 = vadd.f32 0.0, %v590
      %v592 = vpop.f32.mrf.mxu0
      %593 = vmatprep.mubr.f32.mxu0 0.0
      %594 = vmatmul.mubr.f32.gmra.mxu0 %v488
      %v595 = vpop.f32.mrf.mxu0
      %v596 = vadd.f32 0.0, %v595
      %v597 = vpop.f32.mrf.mxu0
      %598 = vdwg.mxu0
      %v600 = vsel %vm465, %v438, 0
      %v603 = vsel %vm465, %v439, 0
      %v606 = vsel %vm465, %v440, 0
      %v609 = vsel %vm465, %v441, 0
      %v612 = vsel %vm465, %v442, 0
      %v615 = vsel %vm465, %v443, 0
      %v618 = vsel %vm465, %v444, 0
      %v621 = vsel %vm465, %v445, 0
      %v624 = vsel %vm490, %v450, 0
      %626 = vmatprep.subr.mxu0 0.0
      %627 = vmatpush1.msra.mxu0 0.0
      %628 = vmatprep.subr.mxu0 0.0
      %629 = vmatpush1.msra.mxu0 0.0
      %630 = vmatprep.subr.mxu0 0.0
      %631 = vmatpush1.msra.mxu0 0.0
      %632 = vmatprep.subr.mxu0 0.0
      %633 = vmatpush1.msra.mxu0 0.0
      %634 = vmatprep.subr.mxu0 0.0
      %635 = vmatpush1.msra.mxu0 0.0
      %636 = vmatprep.subr.mxu0 0.0
      %637 = vmatpush1.msra.mxu0 0.0
      %638 = vmatprep.subr.mxu0 0.0
      %639 = vmatpush1.msra.mxu0 0.0
      %640 = vmatprep.subr.mxu0 0.0
      %641 = vmatpush1.msra.mxu0 0.0
      %642 = vmatprep.subr.mxu0 0.0
      %643 = vmatpush1.msra.mxu0 0.0
      %644 = vmatprep.subr.mxu0 0.0
      %645 = vmatpush1.msra.mxu0 0.0
      %646 = vmatprep.subr.mxu0 0.0
      %647 = vmatpush1.msra.mxu0 0.0
      %648 = vmatprep.subr.mxu0 0.0
      %649 = vmatpush1.msra.mxu0 %v624
      %650 = vmatprep.subr.mxu0 0.0
      %651 = vmatpush1.msra.mxu0 %v449
      %652 = vmatprep.subr.mxu0 0.0
      %653 = vmatpush1.msra.mxu0 %v448
      %654 = vmatprep.subr.mxu0 0.0
      %655 = vmatpush1.msra.mxu0 %v447
      %656 = vmatprep.subr.mxu0 0.0
      %657 = vmatpush1.msra.mxu0 %v446
      %658 = vmatprep.subr.mxu0 0.0
      %659 = vmatpush2.msra.mxu0 0.0
      %660 = vmatprep.subr.mxu0 0.0
      %661 = vmatpush2.msra.mxu0 0.0
      %662 = vmatprep.subr.mxu0 0.0
      %663 = vmatpush2.msra.mxu0 0.0
      %664 = vmatprep.subr.mxu0 0.0
      %665 = vmatpush2.msra.mxu0 0.0
      %666 = vmatprep.subr.mxu0 0.0
      %667 = vmatpush2.msra.mxu0 0.0
      %668 = vmatprep.subr.mxu0 0.0
      %669 = vmatpush2.msra.mxu0 0.0
      %670 = vmatprep.subr.mxu0 0.0
      %671 = vmatpush2.msra.mxu0 0.0
      %672 = vmatprep.subr.mxu0 0.0
      %673 = vmatpush2.msra.mxu0 0.0
      %674 = vmatprep.subr.mxu0 0.0
      %675 = vmatpush2.msra.mxu0 0.0
      %676 = vmatprep.subr.mxu0 0.0
      %677 = vmatpush2.msra.mxu0 0.0
      %678 = vmatprep.subr.mxu0 0.0
      %679 = vmatpush2.msra.mxu0 0.0
      %680 = vmatprep.subr.mxu0 0.0
      %681 = vmatpush2.msra.mxu0 0.0
      %682 = vmatprep.subr.mxu0 0.0
      %683 = vmatpush2.msra.mxu0 0.0
      %684 = vmatprep.subr.mxu0 0.0
      %685 = vmatpush2.msra.mxu0 0.0
      %686 = vmatprep.subr.mxu0 0.0
      %687 = vmatpush2.msra.mxu0 0.0
      %688 = vmatprep.subr.mxu0 0.0
      %689 = vmatpush2.msra.mxu0 0.0
      %690 = vmatprep.mubr.f32.mxu0 0.0
      %691 = vmatmul.mubr.f32.gmra.mxu0 %v600
      %v692 = vpop.f32.mrf.mxu0
      %v693 = vadd.f32 %v561, %v692
      %v694 = vpop.f32.mrf.mxu0
      %695 = vmatprep.mubr.f32.mxu0 0.0
      %696 = vmatmul.mubr.f32.gmra.mxu0 %v603
      %v697 = vpop.f32.mrf.mxu0
      %v698 = vadd.f32 %v566, %v697
      %v699 = vpop.f32.mrf.mxu0
      %700 = vmatprep.mubr.f32.mxu0 0.0
      %701 = vmatmul.mubr.f32.gmra.mxu0 %v606
      %v702 = vpop.f32.mrf.mxu0
      %v703 = vadd.f32 %v571, %v702
      %v704 = vpop.f32.mrf.mxu0
      %705 = vmatprep.mubr.f32.mxu0 0.0
      %706 = vmatmul.mubr.f32.gmra.mxu0 %v609
      %v707 = vpop.f32.mrf.mxu0
      %v708 = vadd.f32 %v576, %v707
      %v709 = vpop.f32.mrf.mxu0
      %710 = vmatprep.mubr.f32.mxu0 0.0
      %711 = vmatmul.mubr.f32.gmra.mxu0 %v612
      %v712 = vpop.f32.mrf.mxu0
      %v713 = vadd.f32 %v581, %v712
      %v714 = vpop.f32.mrf.mxu0
      %715 = vmatprep.mubr.f32.mxu0 0.0
      %716 = vmatmul.mubr.f32.gmra.mxu0 %v615
      %v717 = vpop.f32.mrf.mxu0
      %v718 = vadd.f32 %v586, %v717
      %v719 = vpop.f32.mrf.mxu0
      %720 = vmatprep.mubr.f32.mxu0 0.0
      %721 = vmatmul.mubr.f32.gmra.mxu0 %v618
      %v722 = vpop.f32.mrf.mxu0
      %v723 = vadd.f32 %v591, %v722
      %v724 = vpop.f32.mrf.mxu0
      %725 = vmatprep.mubr.f32.mxu0 0.0
      %726 = vmatmul.mubr.f32.gmra.mxu0 %v621
      %v727 = vpop.f32.mrf.mxu0
      %v728 = vadd.f32 %v596, %v727
      %v729 = vpop.f32.mrf.mxu0
      %730 = vdwg.mxu0
      %v731 = vld [vmem:[%s410] sm:$0xff]
      %v732 = vld [vmem:[%s410 + $0x8] sm:$0xff]
      %v733 = vld [vmem:[%s410 + $0x10] sm:$0xff]
      %v734 = vld [vmem:[%s410 + $0x18] sm:$0xff]
      %v735 = vld [vmem:[%s410 + $0x20] sm:$0xff]
      %v736 = vld [vmem:[%s410 + $0x28] sm:$0xff]
      %v737 = vld [vmem:[%s410 + $0x30] sm:$0xff]
      %v738 = vld [vmem:[%s410 + $0x38] sm:$0xff]
      %s739 = scalar_lea.vmem %s3, 80
      %v740 = vld [vmem:[%s739] sm:$0xff]
      %v741 = vld [vmem:[%s739 + $0x8] sm:$0xff]
      %v742 = vld [vmem:[%s739 + $0x10] sm:$0xff]
      %v743 = vld [vmem:[%s739 + $0x18] sm:$0xff]
      %v744 = vld [vmem:[%s739 + $0x20] sm:$0xf]
      %v746 = vsel %vm465, %v731, 0
      %v749 = vsel %vm465, %v732, 0
      %v752 = vsel %vm465, %v733, 0
      %v755 = vsel %vm465, %v734, 0
      %v758 = vsel %vm465, %v735, 0
      %v761 = vsel %vm465, %v736, 0
      %v764 = vsel %vm465, %v737, 0
      %v767 = vsel %vm465, %v738, 0
      %v770 = vsel %vm490, %v744, 0
      %772 = vmatprep.subr.mxu0 0.0
      %773 = vmatpush1.msra.mxu0 0.0
      %774 = vmatprep.subr.mxu0 0.0
      %775 = vmatpush1.msra.mxu0 0.0
      %776 = vmatprep.subr.mxu0 0.0
      %777 = vmatpush1.msra.mxu0 0.0
      %778 = vmatprep.subr.mxu0 0.0
      %779 = vmatpush1.msra.mxu0 0.0
      %780 = vmatprep.subr.mxu0 0.0
      %781 = vmatpush1.msra.mxu0 0.0
      %782 = vmatprep.subr.mxu0 0.0
      %783 = vmatpush1.msra.mxu0 0.0
      %784 = vmatprep.subr.mxu0 0.0
      %785 = vmatpush1.msra.mxu0 0.0
      %786 = vmatprep.subr.mxu0 0.0
      %787 = vmatpush1.msra.mxu0 0.0
      %788 = vmatprep.subr.mxu0 0.0
      %789 = vmatpush1.msra.mxu0 0.0
      %790 = vmatprep.subr.mxu0 0.0
      %791 = vmatpush1.msra.mxu0 0.0
      %792 = vmatprep.subr.mxu0 0.0
      %793 = vmatpush1.msra.mxu0 0.0
      %794 = vmatprep.subr.mxu0 0.0
      %795 = vmatpush1.msra.mxu0 %v770
      %796 = vmatprep.subr.mxu0 0.0
      %797 = vmatpush1.msra.mxu0 %v743
      %798 = vmatprep.subr.mxu0 0.0
      %799 = vmatpush1.msra.mxu0 %v742
      %800 = vmatprep.subr.mxu0 0.0
      %801 = vmatpush1.msra.mxu0 %v741
      %802 = vmatprep.subr.mxu0 0.0
      %803 = vmatpush1.msra.mxu0 %v740
      %804 = vmatprep.subr.mxu0 0.0
      %805 = vmatpush2.msra.mxu0 0.0
      %806 = vmatprep.subr.mxu0 0.0
      %807 = vmatpush2.msra.mxu0 0.0
      %808 = vmatprep.subr.mxu0 0.0
      %809 = vmatpush2.msra.mxu0 0.0
      %810 = vmatprep.subr.mxu0 0.0
      %811 = vmatpush2.msra.mxu0 0.0
      %812 = vmatprep.subr.mxu0 0.0
      %813 = vmatpush2.msra.mxu0 0.0
      %814 = vmatprep.subr.mxu0 0.0
      %815 = vmatpush2.msra.mxu0 0.0
      %816 = vmatprep.subr.mxu0 0.0
      %817 = vmatpush2.msra.mxu0 0.0
      %818 = vmatprep.subr.mxu0 0.0
      %819 = vmatpush2.msra.mxu0 0.0
      %820 = vmatprep.subr.mxu0 0.0
      %821 = vmatpush2.msra.mxu0 0.0
      %822 = vmatprep.subr.mxu0 0.0
      %823 = vmatpush2.msra.mxu0 0.0
      %824 = vmatprep.subr.mxu0 0.0
      %825 = vmatpush2.msra.mxu0 0.0
      %826 = vmatprep.subr.mxu0 0.0
      %827 = vmatpush2.msra.mxu0 0.0
      %828 = vmatprep.subr.mxu0 0.0
      %829 = vmatpush2.msra.mxu0 0.0
      %830 = vmatprep.subr.mxu0 0.0
      %831 = vmatpush2.msra.mxu0 0.0
      %832 = vmatprep.subr.mxu0 0.0
      %833 = vmatpush2.msra.mxu0 0.0
      %834 = vmatprep.subr.mxu0 0.0
      %835 = vmatpush2.msra.mxu0 0.0
      %836 = vmatprep.mubr.f32.mxu0 0.0
      %837 = vmatmul.mubr.f32.gmra.mxu0 %v746
      %v838 = vpop.f32.mrf.mxu0
      %v839 = vadd.f32 0.0, %v838
      %v840 = vpop.f32.mrf.mxu0
      %841 = vmatprep.mubr.f32.mxu0 0.0
      %842 = vmatmul.mubr.f32.gmra.mxu0 %v749
      %v843 = vpop.f32.mrf.mxu0
      %v844 = vadd.f32 0.0, %v843
      %v845 = vpop.f32.mrf.mxu0
      %846 = vmatprep.mubr.f32.mxu0 0.0
      %847 = vmatmul.mubr.f32.gmra.mxu0 %v752
      %v848 = vpop.f32.mrf.mxu0
      %v849 = vadd.f32 0.0, %v848
      %v850 = vpop.f32.mrf.mxu0
      %851 = vmatprep.mubr.f32.mxu0 0.0
      %852 = vmatmul.mubr.f32.gmra.mxu0 %v755
      %v853 = vpop.f32.mrf.mxu0
      %v854 = vadd.f32 0.0, %v853
      %v855 = vpop.f32.mrf.mxu0
      %856 = vmatprep.mubr.f32.mxu0 0.0
      %857 = vmatmul.mubr.f32.gmra.mxu0 %v758
      %v858 = vpop.f32.mrf.mxu0
      %v859 = vadd.f32 0.0, %v858
      %v860 = vpop.f32.mrf.mxu0
      %861 = vmatprep.mubr.f32.mxu0 0.0
      %862 = vmatmul.mubr.f32.gmra.mxu0 %v761
      %v863 = vpop.f32.mrf.mxu0
      %v864 = vadd.f32 0.0, %v863
      %v865 = vpop.f32.mrf.mxu0
      %866 = vmatprep.mubr.f32.mxu0 0.0
      %867 = vmatmul.mubr.f32.gmra.mxu0 %v764
      %v868 = vpop.f32.mrf.mxu0
      %v869 = vadd.f32 0.0, %v868
      %v870 = vpop.f32.mrf.mxu0
      %871 = vmatprep.mubr.f32.mxu0 0.0
      %872 = vmatmul.mubr.f32.gmra.mxu0 %v767
      %v873 = vpop.f32.mrf.mxu0
      %v874 = vadd.f32 0.0, %v873
      %v875 = vpop.f32.mrf.mxu0
      %876 = vdwg.mxu0
      %v877 = vadd.f32 %v693, %v839
      %v878 = vadd.f32 %v698, %v844
      %v879 = vadd.f32 %v703, %v849
      %v880 = vadd.f32 %v708, %v854
      %v881 = vadd.f32 %v713, %v859
      %v882 = vadd.f32 %v718, %v864
      %v883 = vadd.f32 %v723, %v869
      %v884 = vadd.f32 %v728, %v874
      %vm885 = vcmask 64512
      %886 = vst.msk [vmem:[%s425] sm:$0xff] %vm885, %v877
      %887 = vst.msk [vmem:[%s425 + $0x8] sm:$0xff] %vm885, %v878
      %888 = vst.msk [vmem:[%s425 + $0x10] sm:$0xff] %vm885, %v879
      %889 = vst.msk [vmem:[%s425 + $0x18] sm:$0xff] %vm885, %v880
      %890 = vst.msk [vmem:[%s425 + $0x20] sm:$0xff] %vm885, %v881
      %891 = vst.msk [vmem:[%s425 + $0x28] sm:$0xff] %vm885, %v882
      %892 = vst.msk [vmem:[%s425 + $0x30] sm:$0xff] %vm885, %v883
      %893 = vst.msk [vmem:[%s425 + $0x38] sm:$0xff] %vm885, %v884
      %v894 = vsel %vm885, %v877, 0.0
      %v895 = vsel %vm885, %v878, 0.0
      %v896 = vadd.f32 %v894, %v895
      %v897 = vsel %vm885, %v879, 0.0
      %v898 = vadd.f32 %v896, %v897
      %v899 = vsel %vm885, %v880, 0.0
      %v900 = vadd.f32 %v898, %v899
      %v901 = vsel %vm885, %v881, 0.0
      %v902 = vadd.f32 %v900, %v901
      %v903 = vsel %vm885, %v882, 0.0
      %v904 = vadd.f32 %v902, %v903
      %v905 = vsel %vm885, %v883, 0.0
      %v906 = vadd.f32 %v904, %v905
      %v907 = vsel %vm885, %v884, 0.0
      %v908 = vadd.f32 %v906, %v907
      %v909 = vrot.slane %v908, 4
      %v910 = vadd.f32 %v908, %v909
      %v911 = vrot.slane %v910, 2
      %v912 = vadd.f32 %v910, %v911
      %v913 = vrot.slane %v912, 1
      %v914 = vadd.f32 %v912, %v913
      %vm915 = vcmask 57344
      %916 = vst.msk [vmem:[%s437] sm:$0x1] %vm915, %v914
      %v917 = vmul.f32 %v877, %v877
      %v918 = vmul.f32 %v878, %v878
      %v919 = vmul.f32 %v879, %v879
      %v920 = vmul.f32 %v880, %v880
      %v921 = vmul.f32 %v881, %v881
      %v922 = vmul.f32 %v882, %v882
      %v923 = vmul.f32 %v883, %v883
      %v924 = vmul.f32 %v884, %v884
      %v925 = vsel %vm885, %v917, 0.0
      %v926 = vsel %vm885, %v918, 0.0
      %v927 = vadd.f32 %v925, %v926
      %v928 = vsel %vm885, %v919, 0.0
      %v929 = vadd.f32 %v927, %v928
      %v930 = vsel %vm885, %v920, 0.0
      %v931 = vadd.f32 %v929, %v930
      %v932 = vsel %vm885, %v921, 0.0
      %v933 = vadd.f32 %v931, %v932
      %v934 = vsel %vm885, %v922, 0.0
      %v935 = vadd.f32 %v933, %v934
      %v936 = vsel %vm885, %v923, 0.0
      %v937 = vadd.f32 %v935, %v936
      %v938 = vsel %vm885, %v924, 0.0
      %v939 = vadd.f32 %v937, %v938
      %v940 = vrot.slane %v939, 4
      %v941 = vadd.f32 %v939, %v940
      %v942 = vrot.slane %v941, 2
      %v943 = vadd.f32 %v941, %v942
      %v944 = vrot.slane %v943, 1
      %v945 = vadd.f32 %v943, %v944
      %946 = vst.msk [vmem:[%s437 + $0x1] sm:$0x1] %vm915, %v945
      %s947 = smul.u32 8, %s24
      %p948 = scmp.lt.s32.totalorder %s22, 1
      %s949 = scalar_select %p948, %s22, 1
      %p950 = scmp.lt.s32.totalorder %s23, 7
      %s951 = scalar_select %p950, %s23, 7
      %p952 = scmp.lt.s32.totalorder %s947, 7
      %s953 = scalar_select %p952, %s947, 7
      %s954 = smul.addr %s951, 8
      %s955 = sadd.s32 %s953, %s954
      %s956 = smul.addr %s949, 64
      %s957 = sadd.s32 %s955, %s956
      %s958 = smul.addr %s957, 8
      %s959 = scalar_lea.vmem %s4, %s958
      %p960 = scmp.lt.s32.totalorder %s22, 1
      %s961 = scalar_select %p960, %s22, 1
      %p962 = scmp.lt.s32.totalorder %s23, 7
      %s963 = scalar_select %p962, %s23, 7
      %p964 = scmp.lt.s32.totalorder %s24, 0
      %s965 = scalar_select %p964, %s24, 0
      %s966 = sadd.s32 %s965, %s963
      %s967 = smul.addr %s961, 8
      %s968 = sadd.s32 %s966, %s967
      %s969 = smul.addr %s968, 2
      %s970 = scalar_lea.vmem %s5, %s969
      // Predicated region
      $region37: #{residual_path.2} parent=35 // pred_check
        %p971 = pneg %p173
      $region38: #{residual_path.2} parent=35 // pred_check_branch
        %973 = sbr.rel (%p971) target = $region40
      $region39: #{residual_path.2} parent=35 // pred_region
        %s974 = smul.u32 8, %s24
      $region40: #{residual_path.2} parent=35 // pred_fallthru
        _
      // Predicated region
      $region41: #{residual_path.2} parent=35 // pred_check
        %p975 = pneg %p203
      $region42: #{residual_path.2} parent=35 // pred_check_branch
        %977 = sbr.rel (%p975) target = $region44
      $region43: #{residual_path.2} parent=35 // pred_region
        _
      $region44: #{residual_path.2} parent=35 // pred_fallthru
        _
    $region36: #{residual_path.2} parent=5 // pred_fallthru
      _
    %p978 = scmp.le.s32.totalorder 2, %s12
    // Predicated region
    $region45: #{residual_path.2} parent=5 // pred_check
      %p979 = pneg %p978
    $region46: #{residual_path.2} parent=5 // pred_check_branch
      %981 = sbr.rel (%p979) target = $region48
    $region47: #{residual_path.2} parent=5 // pred_region
      %s982 = ssub.s32 %s12, 2
      // Predicated region
      $region49: #{residual_path.2} parent=47 // pred_check
        %p983 = pneg %p179
      $region50: #{residual_path.2} parent=47 // pred_check_branch
        %985 = sbr.rel (%p983) target = $region52
      $region51: #{residual_path.2} parent=47 // pred_region
        %s986 = smul.u32 8, %s27
        %p987 = scmp.lt.s32.totalorder %s25, 1
        %s988 = scalar_select %p987, %s25, 1
        %p989 = scmp.lt.s32.totalorder %s26, 7
        %s990 = scalar_select %p989, %s26, 7
        %p991 = scmp.lt.s32.totalorder %s986, 7
        %s992 = scalar_select %p991, %s986, 7
        %s993 = smul.addr %s990, 8
        %s994 = sadd.s32 %s992, %s993
        %s995 = smul.addr %s988, 64
        %s996 = sadd.s32 %s994, %s995
        %s997 = smul.addr %s996, 8
        %s998 = scalar_lea.vmem %s4, %s997
      $region52: #{residual_path.2} parent=47 // pred_fallthru
        _
      // Predicated region
      $region53: #{residual_path.2} parent=47 // pred_check
        %p999 = pneg %p209
      $region54: #{residual_path.2} parent=47 // pred_check_branch
        %1001 = sbr.rel (%p999) target = $region56
      $region55: #{residual_path.2} parent=47 // pred_region
        %p1002 = scmp.lt.s32.totalorder %s25, 1
        %s1003 = scalar_select %p1002, %s25, 1
        %p1004 = scmp.lt.s32.totalorder %s26, 7
        %s1005 = scalar_select %p1004, %s26, 7
        %p1006 = scmp.lt.s32.totalorder %s27, 0
        %s1007 = scalar_select %p1006, %s27, 0
        %s1008 = sadd.s32 %s1007, %s1005
        %s1009 = smul.addr %s1003, 8
        %s1010 = sadd.s32 %s1008, %s1009
        %s1011 = smul.addr %s1010, 2
        %s1012 = scalar_lea.vmem %s5, %s1011
      $region56: #{residual_path.2} parent=47 // pred_fallthru
        _
    $region48: #{residual_path.2} parent=5 // pred_fallthru
      _
  $region6: #{residual_path.2} parent=0 // loop_footer
    %s16 = sadd.s32 1, %s12
  $region7: #{residual_path.2} parent=0 // loop_footer_branch
    %11 = sbr.rel target = $region3
  $region8: #{residual_path.2} parent=0 // loop_exit
    _

// kernel: residual_path.3
$region0: #{residual_path.3}
  #allocation0 [shape = 'u32[]', space=smem, size = 0x4, offset = 0x4, fixed_abs, tag = 'smem constant byte address 0x4 - core index']
  #allocation1 [shape = 'u32[144,128]{1,0:T(1,128)}', space=vmem, size = 0x12000, scoped, tag = 'internal scratch']
  %s0 = inlined_call_operand.vmem [shape: f32[1024,8], index: 0, kind: input, shape index: {}, may-alias: {0,3}]
  %s1 = inlined_call_operand.vmem [shape: f32[1,8], index: 1, kind: input, shape index: {}]
  %s2 = inlined_call_operand.vmem [shape: f32[1,8], index: 2, kind: input, shape index: {}]
  %s3 = inlined_call_operand.vmem [shape: f32[1024,8], index: 3, kind: output, shape index: {}, may-alias: {0,3}]
  %s4 = sld [smem:[#allocation0]]
  $region22: #{residual_path.3} parent=0
    _
  %s6 = ssub.s32 1, %s4
  %s7 = scalar_select 0, %s6, %s4
  // Predicated region
  $region2: #{residual_path.3} parent=0 // pred_check
    _
  $region3: #{residual_path.3} parent=0 // pred_check_branch
    %9 = sbr.rel (0) target = $region5
  $region4: #{residual_path.3} parent=0 // pred_region
    _
  $region5: #{residual_path.3} parent=0 // pred_fallthru
    _
  // Predicated region
  $region6: #{residual_path.3} parent=0 // pred_check
    _
  $region7: #{residual_path.3} parent=0 // pred_check_branch
    %11 = sbr.rel (0) target = $region9
  $region8: #{residual_path.3} parent=0 // pred_region
    _
  $region9: #{residual_path.3} parent=0 // pred_fallthru
    _
  // Predicated region
  $region10: #{residual_path.3} parent=0 // pred_check
    _
  $region11: #{residual_path.3} parent=0 // pred_check_branch
    %13 = sbr.rel (0) target = $region13
  $region12: #{residual_path.3} parent=0 // pred_region
    _
  $region13: #{residual_path.3} parent=0 // pred_fallthru
    _
  %v14 = vld [vmem:[%s0] sm:$0xff]
  %v15 = vld [vmem:[%s0 + $0x8] sm:$0xff]
  %v16 = vld [vmem:[%s0 + $0x10] sm:$0xff]
  %v17 = vld [vmem:[%s0 + $0x18] sm:$0xff]
  %v18 = vld [vmem:[%s0 + $0x20] sm:$0xff]
  %v19 = vld [vmem:[%s0 + $0x28] sm:$0xff]
  %v20 = vld [vmem:[%s0 + $0x30] sm:$0xff]
  %v21 = vld [vmem:[%s0 + $0x38] sm:$0xff]
  %v22 = vld [vmem:[%s0 + $0x40] sm:$0xff]
  %v23 = vld [vmem:[%s0 + $0x48] sm:$0xff]
  %v24 = vld [vmem:[%s0 + $0x50] sm:$0xff]
  %v25 = vld [vmem:[%s0 + $0x58] sm:$0xff]
  %v26 = vld [vmem:[%s0 + $0x60] sm:$0xff]
  %v27 = vld [vmem:[%s0 + $0x68] sm:$0xff]
  %v28 = vld [vmem:[%s0 + $0x70] sm:$0xff]
  %v29 = vld [vmem:[%s0 + $0x78] sm:$0xff]
  %v30 = vld [vmem:[%s0 + $0x80] sm:$0xff]
  %v31 = vld [vmem:[%s0 + $0x88] sm:$0xff]
  %v32 = vld [vmem:[%s0 + $0x90] sm:$0xff]
  %v33 = vld [vmem:[%s0 + $0x98] sm:$0xff]
  %v34 = vld [vmem:[%s0 + $0xa0] sm:$0xff]
  %v35 = vld [vmem:[%s0 + $0xa8] sm:$0xff]
  %v36 = vld [vmem:[%s0 + $0xb0] sm:$0xff]
  %v37 = vld [vmem:[%s0 + $0xb8] sm:$0xff]
  %v38 = vld [vmem:[%s0 + $0xc0] sm:$0xff]
  %v39 = vld [vmem:[%s0 + $0xc8] sm:$0xff]
  %v40 = vld [vmem:[%s0 + $0xd0] sm:$0xff]
  %v41 = vld [vmem:[%s0 + $0xd8] sm:$0xff]
  %v42 = vld [vmem:[%s0 + $0xe0] sm:$0xff]
  %v43 = vld [vmem:[%s0 + $0xe8] sm:$0xff]
  %v44 = vld [vmem:[%s0 + $0xf0] sm:$0xff]
  %v45 = vld [vmem:[%s0 + $0xf8] sm:$0xff]
  %v46 = vld [vmem:[%s0 + $0x100] sm:$0xff]
  %v47 = vld [vmem:[%s0 + $0x108] sm:$0xff]
  %v48 = vld [vmem:[%s0 + $0x110] sm:$0xff]
  %v49 = vld [vmem:[%s0 + $0x118] sm:$0xff]
  %v50 = vld [vmem:[%s0 + $0x120] sm:$0xff]
  %v51 = vld [vmem:[%s0 + $0x128] sm:$0xff]
  %v52 = vld [vmem:[%s0 + $0x130] sm:$0xff]
  %v53 = vld [vmem:[%s0 + $0x138] sm:$0xff]
  %v54 = vld [vmem:[%s0 + $0x140] sm:$0xff]
  %v55 = vld [vmem:[%s0 + $0x148] sm:$0xff]
  %v56 = vld [vmem:[%s0 + $0x150] sm:$0xff]
  %v57 = vld [vmem:[%s0 + $0x158] sm:$0xff]
  %v58 = vld [vmem:[%s0 + $0x160] sm:$0xff]
  %v59 = vld [vmem:[%s0 + $0x168] sm:$0xff]
  %v60 = vld [vmem:[%s0 + $0x170] sm:$0xff]
  %v61 = vld [vmem:[%s0 + $0x178] sm:$0xff]
  %v62 = vld [vmem:[%s0 + $0x180] sm:$0xff]
  %v63 = vld [vmem:[%s0 + $0x188] sm:$0xff]
  %v64 = vld [vmem:[%s0 + $0x190] sm:$0xff]
  %v65 = vld [vmem:[%s0 + $0x198] sm:$0xff]
  %v66 = vld [vmem:[%s0 + $0x1a0] sm:$0xff]
  %v67 = vld [vmem:[%s0 + $0x1a8] sm:$0xff]
  %v68 = vld [vmem:[%s0 + $0x1b0] sm:$0xff]
  %v69 = vld [vmem:[%s0 + $0x1b8] sm:$0xff]
  %v70 = vld [vmem:[%s0 + $0x1c0] sm:$0xff]
  %v71 = vld [vmem:[%s0 + $0x1c8] sm:$0xff]
  %v72 = vld [vmem:[%s0 + $0x1d0] sm:$0xff]
  %v73 = vld [vmem:[%s0 + $0x1d8] sm:$0xff]
  %v74 = vld [vmem:[%s0 + $0x1e0] sm:$0xff]
  %v75 = vld [vmem:[%s0 + $0x1e8] sm:$0xff]
  %v76 = vld [vmem:[%s0 + $0x1f0] sm:$0xff]
  %v77 = vld [vmem:[%s0 + $0x1f8] sm:$0xff]
  %v78 = vld [vmem:[%s0 + $0x200] sm:$0xff]
  %v79 = vld [vmem:[%s0 + $0x208] sm:$0xff]
  %v80 = vld [vmem:[%s0 + $0x210] sm:$0xff]
  %v81 = vld [vmem:[%s0 + $0x218] sm:$0xff]
  %v82 = vld [vmem:[%s0 + $0x220] sm:$0xff]
  %v83 = vld [vmem:[%s0 + $0x228] sm:$0xff]
  %v84 = vld [vmem:[%s0 + $0x230] sm:$0xff]
  %v85 = vld [vmem:[%s0 + $0x238] sm:$0xff]
  %v86 = vld [vmem:[%s0 + $0x240] sm:$0xff]
  %v87 = vld [vmem:[%s0 + $0x248] sm:$0xff]
  %v88 = vld [vmem:[%s0 + $0x250] sm:$0xff]
  %v89 = vld [vmem:[%s0 + $0x258] sm:$0xff]
  %v90 = vld [vmem:[%s0 + $0x260] sm:$0xff]
  %v91 = vld [vmem:[%s0 + $0x268] sm:$0xff]
  %v92 = vld [vmem:[%s0 + $0x270] sm:$0xff]
  %v93 = vld [vmem:[%s0 + $0x278] sm:$0xff]
  %v94 = vld [vmem:[%s0 + $0x280] sm:$0xff]
  %v95 = vld [vmem:[%s0 + $0x288] sm:$0xff]
  %v96 = vld [vmem:[%s0 + $0x290] sm:$0xff]
  %v97 = vld [vmem:[%s0 + $0x298] sm:$0xff]
  %v98 = vld [vmem:[%s0 + $0x2a0] sm:$0xff]
  %v99 = vld [vmem:[%s0 + $0x2a8] sm:$0xff]
  %v100 = vld [vmem:[%s0 + $0x2b0] sm:$0xff]
  %v101 = vld [vmem:[%s0 + $0x2b8] sm:$0xff]
  %v102 = vld [vmem:[%s0 + $0x2c0] sm:$0xff]
  %v103 = vld [vmem:[%s0 + $0x2c8] sm:$0xff]
  %v104 = vld [vmem:[%s0 + $0x2d0] sm:$0xff]
  %v105 = vld [vmem:[%s0 + $0x2d8] sm:$0xff]
  %v106 = vld [vmem:[%s0 + $0x2e0] sm:$0xff]
  %v107 = vld [vmem:[%s0 + $0x2e8] sm:$0xff]
  %v108 = vld [vmem:[%s0 + $0x2f0] sm:$0xff]
  %v109 = vld [vmem:[%s0 + $0x2f8] sm:$0xff]
  %v110 = vld [vmem:[%s0 + $0x300] sm:$0xff]
  %v111 = vld [vmem:[%s0 + $0x308] sm:$0xff]
  %v112 = vld [vmem:[%s0 + $0x310] sm:$0xff]
  %v113 = vld [vmem:[%s0 + $0x318] sm:$0xff]
  %v114 = vld [vmem:[%s0 + $0x320] sm:$0xff]
  %v115 = vld [vmem:[%s0 + $0x328] sm:$0xff]
  %v116 = vld [vmem:[%s0 + $0x330] sm:$0xff]
  %v117 = vld [vmem:[%s0 + $0x338] sm:$0xff]
  %v118 = vld [vmem:[%s0 + $0x340] sm:$0xff]
  %v119 = vld [vmem:[%s0 + $0x348] sm:$0xff]
  %v120 = vld [vmem:[%s0 + $0x350] sm:$0xff]
  %v121 = vld [vmem:[%s0 + $0x358] sm:$0xff]
  %v122 = vld [vmem:[%s0 + $0x360] sm:$0xff]
  %v123 = vld [vmem:[%s0 + $0x368] sm:$0xff]
  %v124 = vld [vmem:[%s0 + $0x370] sm:$0xff]
  %v125 = vld [vmem:[%s0 + $0x378] sm:$0xff]
  %v126 = vld [vmem:[%s0 + $0x380] sm:$0xff]
  %v127 = vld [vmem:[%s0 + $0x388] sm:$0xff]
  %v128 = vld [vmem:[%s0 + $0x390] sm:$0xff]
  %v129 = vld [vmem:[%s0 + $0x398] sm:$0xff]
  %v130 = vld [vmem:[%s0 + $0x3a0] sm:$0xff]
  %v131 = vld [vmem:[%s0 + $0x3a8] sm:$0xff]
  %v132 = vld [vmem:[%s0 + $0x3b0] sm:$0xff]
  %v133 = vld [vmem:[%s0 + $0x3b8] sm:$0xff]
  %v134 = vld [vmem:[%s0 + $0x3c0] sm:$0xff]
  %v135 = vld [vmem:[%s0 + $0x3c8] sm:$0xff]
  %v136 = vld [vmem:[%s0 + $0x3d0] sm:$0xff]
  %v137 = vld [vmem:[%s0 + $0x3d8] sm:$0xff]
  %v138 = vld [vmem:[%s0 + $0x3e0] sm:$0xff]
  %v139 = vld [vmem:[%s0 + $0x3e8] sm:$0xff]
  %v140 = vld [vmem:[%s0 + $0x3f0] sm:$0xff]
  %v141 = vld [vmem:[%s0 + $0x3f8] sm:$0xff]
  %v142 = vld [vmem:[%s1] sm:$0x1]
  %v144 = vlaneseq
  %v145 = vshrl.u32 %v144, 7
  %v146 = vsub.s32 0, %v145
  %v147 = vrot.slane %v142, %v146
  %v149 = vmul.f32 %v14, %v147
  %v150 = vmul.f32 %v15, %v147
  %v151 = vmul.f32 %v16, %v147
  %v152 = vmul.f32 %v17, %v147
  %v153 = vmul.f32 %v18, %v147
  %v154 = vmul.f32 %v19, %v147
  %v155 = vmul.f32 %v20, %v147
  %v156 = vmul.f32 %v21, %v147
  %v157 = vmul.f32 %v22, %v147
  %v158 = vmul.f32 %v23, %v147
  %v159 = vmul.f32 %v24, %v147
  %v160 = vmul.f32 %v25, %v147
  %v161 = vmul.f32 %v26, %v147
  %v162 = vmul.f32 %v27, %v147
  %v163 = vmul.f32 %v28, %v147
  %v164 = vmul.f32 %v29, %v147
  %v165 = vmul.f32 %v30, %v147
  %v166 = vmul.f32 %v31, %v147
  %v167 = vmul.f32 %v32, %v147
  %v168 = vmul.f32 %v33, %v147
  %v169 = vmul.f32 %v34, %v147
  %v170 = vmul.f32 %v35, %v147
  %v171 = vmul.f32 %v36, %v147
  %v172 = vmul.f32 %v37, %v147
  %v173 = vmul.f32 %v38, %v147
  %v174 = vmul.f32 %v39, %v147
  %v175 = vmul.f32 %v40, %v147
  %v176 = vmul.f32 %v41, %v147
  %v177 = vmul.f32 %v42, %v147
  %v178 = vmul.f32 %v43, %v147
  %v179 = vmul.f32 %v44, %v147
  %v180 = vmul.f32 %v45, %v147
  %v181 = vmul.f32 %v46, %v147
  %v182 = vmul.f32 %v47, %v147
  %v183 = vmul.f32 %v48, %v147
  %v184 = vmul.f32 %v49, %v147
  %v185 = vmul.f32 %v50, %v147
  %v186 = vmul.f32 %v51, %v147
  %v187 = vmul.f32 %v52, %v147
  %v188 = vmul.f32 %v53, %v147
  %v189 = vmul.f32 %v54, %v147
  %v190 = vmul.f32 %v55, %v147
  %v191 = vmul.f32 %v56, %v147
  %v192 = vmul.f32 %v57, %v147
  %v193 = vmul.f32 %v58, %v147
  %v194 = vmul.f32 %v59, %v147
  %v195 = vmul.f32 %v60, %v147
  %v196 = vmul.f32 %v61, %v147
  %v197 = vmul.f32 %v62, %v147
  %v198 = vmul.f32 %v63, %v147
  %v199 = vmul.f32 %v64, %v147
  %v200 = vmul.f32 %v65, %v147
  %v201 = vmul.f32 %v66, %v147
  %v202 = vmul.f32 %v67, %v147
  %v203 = vmul.f32 %v68, %v147
  %v204 = vmul.f32 %v69, %v147
  %v205 = vmul.f32 %v70, %v147
  %v206 = vmul.f32 %v71, %v147
  %v207 = vmul.f32 %v72, %v147
  %v208 = vmul.f32 %v73, %v147
  %v209 = vmul.f32 %v74, %v147
  %v210 = vmul.f32 %v75, %v147
  %v211 = vmul.f32 %v76, %v147
  %v212 = vmul.f32 %v77, %v147
  %v213 = vmul.f32 %v78, %v147
  %v214 = vmul.f32 %v79, %v147
  %v215 = vmul.f32 %v80, %v147
  %v216 = vmul.f32 %v81, %v147
  %v217 = vmul.f32 %v82, %v147
  %v218 = vmul.f32 %v83, %v147
  %v219 = vmul.f32 %v84, %v147
  %v220 = vmul.f32 %v85, %v147
  %v221 = vmul.f32 %v86, %v147
  %v222 = vmul.f32 %v87, %v147
  %v223 = vmul.f32 %v88, %v147
  %v224 = vmul.f32 %v89, %v147
  %v225 = vmul.f32 %v90, %v147
  %v226 = vmul.f32 %v91, %v147
  %v227 = vmul.f32 %v92, %v147
  %v228 = vmul.f32 %v93, %v147
  %v229 = vmul.f32 %v94, %v147
  %v230 = vmul.f32 %v95, %v147
  %v231 = vmul.f32 %v96, %v147
  %v232 = vmul.f32 %v97, %v147
  %v233 = vmul.f32 %v98, %v147
  %v234 = vmul.f32 %v99, %v147
  %v235 = vmul.f32 %v100, %v147
  %v236 = vmul.f32 %v101, %v147
  %v237 = vmul.f32 %v102, %v147
  %v238 = vmul.f32 %v103, %v147
  %v239 = vmul.f32 %v104, %v147
  %v240 = vmul.f32 %v105, %v147
  %v241 = vmul.f32 %v106, %v147
  %v242 = vmul.f32 %v107, %v147
  %v243 = vmul.f32 %v108, %v147
  %v244 = vmul.f32 %v109, %v147
  %v245 = vmul.f32 %v110, %v147
  %v246 = vmul.f32 %v111, %v147
  %v247 = vmul.f32 %v112, %v147
  %v248 = vmul.f32 %v113, %v147
  %v249 = vmul.f32 %v114, %v147
  %v250 = vmul.f32 %v115, %v147
  %v251 = vmul.f32 %v116, %v147
  %v252 = vmul.f32 %v117, %v147
  %v253 = vmul.f32 %v118, %v147
  %v254 = vmul.f32 %v119, %v147
  %v255 = vmul.f32 %v120, %v147
  %v256 = vmul.f32 %v121, %v147
  %v257 = vmul.f32 %v122, %v147
  %v258 = vmul.f32 %v123, %v147
  %v259 = vmul.f32 %v124, %v147
  %v260 = vmul.f32 %v125, %v147
  %v261 = vmul.f32 %v126, %v147
  %v262 = vmul.f32 %v127, %v147
  %v263 = vmul.f32 %v128, %v147
  %v264 = vmul.f32 %v129, %v147
  %v265 = vmul.f32 %v130, %v147
  %v266 = vmul.f32 %v131, %v147
  %v267 = vmul.f32 %v132, %v147
  %v268 = vmul.f32 %v133, %v147
  %v269 = vmul.f32 %v134, %v147
  %v270 = vmul.f32 %v135, %v147
  %v271 = vmul.f32 %v136, %v147
  %v272 = vmul.f32 %v137, %v147
  %v273 = vmul.f32 %v138, %v147
  %v274 = vmul.f32 %v139, %v147
  %v275 = vmul.f32 %v140, %v147
  %v276 = vmul.f32 %v141, %v147
  %v277 = vld [vmem:[%s2] sm:$0x1]
  %v279 = vlaneseq
  %v280 = vshrl.u32 %v279, 7
  %v281 = vsub.s32 0, %v280
  %v282 = vrot.slane %v277, %v281
  %v284 = vadd.f32 %v149, %v282
  %v285 = vadd.f32 %v150, %v282
  %v286 = vadd.f32 %v151, %v282
  %v287 = vadd.f32 %v152, %v282
  %v288 = vadd.f32 %v153, %v282
  %v289 = vadd.f32 %v154, %v282
  %v290 = vadd.f32 %v155, %v282
  %v291 = vadd.f32 %v156, %v282
  %v292 = vadd.f32 %v157, %v282
  %v293 = vadd.f32 %v158, %v282
  %v294 = vadd.f32 %v159, %v282
  %v295 = vadd.f32 %v160, %v282
  %v296 = vadd.f32 %v161, %v282
  %v297 = vadd.f32 %v162, %v282
  %v298 = vadd.f32 %v163, %v282
  %v299 = vadd.f32 %v164, %v282
  %v300 = vadd.f32 %v165, %v282
  %v301 = vadd.f32 %v166, %v282
  %v302 = vadd.f32 %v167, %v282
  %v303 = vadd.f32 %v168, %v282
  %v304 = vadd.f32 %v169, %v282
  %v305 = vadd.f32 %v170, %v282
  %v306 = vadd.f32 %v171, %v282
  %v307 = vadd.f32 %v172, %v282
  %v308 = vadd.f32 %v173, %v282
  %v309 = vadd.f32 %v174, %v282
  %v310 = vadd.f32 %v175, %v282
  %v311 = vadd.f32 %v176, %v282
  %v312 = vadd.f32 %v177, %v282
  %v313 = vadd.f32 %v178, %v282
  %v314 = vadd.f32 %v179, %v282
  %v315 = vadd.f32 %v180, %v282
  %v316 = vadd.f32 %v181, %v282
  %v317 = vadd.f32 %v182, %v282
  %v318 = vadd.f32 %v183, %v282
  %v319 = vadd.f32 %v184, %v282
  %v320 = vadd.f32 %v185, %v282
  %v321 = vadd.f32 %v186, %v282
  %v322 = vadd.f32 %v187, %v282
  %v323 = vadd.f32 %v188, %v282
  %v324 = vadd.f32 %v189, %v282
  %v325 = vadd.f32 %v190, %v282
  %v326 = vadd.f32 %v191, %v282
  %v327 = vadd.f32 %v192, %v282
  %v328 = vadd.f32 %v193, %v282
  %v329 = vadd.f32 %v194, %v282
  %v330 = vadd.f32 %v195, %v282
  %v331 = vadd.f32 %v196, %v282
  %v332 = vadd.f32 %v197, %v282
  %v333 = vadd.f32 %v198, %v282
  %v334 = vadd.f32 %v199, %v282
  %v335 = vadd.f32 %v200, %v282
  %v336 = vadd.f32 %v201, %v282
  %v337 = vadd.f32 %v202, %v282
  %v338 = vadd.f32 %v203, %v282
  %v339 = vadd.f32 %v204, %v282
  %v340 = vadd.f32 %v205, %v282
  %v341 = vadd.f32 %v206, %v282
  %v342 = vadd.f32 %v207, %v282
  %v343 = vadd.f32 %v208, %v282
  %v344 = vadd.f32 %v209, %v282
  %v345 = vadd.f32 %v210, %v282
  %v346 = vadd.f32 %v211, %v282
  %v347 = vadd.f32 %v212, %v282
  %v348 = vadd.f32 %v213, %v282
  %v349 = vadd.f32 %v214, %v282
  %v350 = vadd.f32 %v215, %v282
  %v351 = vadd.f32 %v216, %v282
  %v352 = vadd.f32 %v217, %v282
  %v353 = vadd.f32 %v218, %v282
  %v354 = vadd.f32 %v219, %v282
  %v355 = vadd.f32 %v220, %v282
  %v356 = vadd.f32 %v221, %v282
  %v357 = vadd.f32 %v222, %v282
  %v358 = vadd.f32 %v223, %v282
  %v359 = vadd.f32 %v224, %v282
  %v360 = vadd.f32 %v225, %v282
  %v361 = vadd.f32 %v226, %v282
  %v362 = vadd.f32 %v227, %v282
  %v363 = vadd.f32 %v228, %v282
  %v364 = vadd.f32 %v229, %v282
  %v365 = vadd.f32 %v230, %v282
  %v366 = vadd.f32 %v231, %v282
  %v367 = vadd.f32 %v232, %v282
  %v368 = vadd.f32 %v233, %v282
  %v369 = vadd.f32 %v234, %v282
  %v370 = vadd.f32 %v235, %v282
  %v371 = vadd.f32 %v236, %v282
  %v372 = vadd.f32 %v237, %v282
  %v373 = vadd.f32 %v238, %v282
  %v374 = vadd.f32 %v239, %v282
  %v375 = vadd.f32 %v240, %v282
  %v376 = vadd.f32 %v241, %v282
  %v377 = vadd.f32 %v242, %v282
  %v378 = vadd.f32 %v243, %v282
  %v379 = vadd.f32 %v244, %v282
  %v380 = vadd.f32 %v245, %v282
  %v381 = vadd.f32 %v246, %v282
  %v382 = vadd.f32 %v247, %v282
  %v383 = vadd.f32 %v248, %v282
  %v384 = vadd.f32 %v249, %v282
  %v385 = vadd.f32 %v250, %v282
  %v386 = vadd.f32 %v251, %v282
  %v387 = vadd.f32 %v252, %v282
  %v388 = vadd.f32 %v253, %v282
  %v389 = vadd.f32 %v254, %v282
  %v390 = vadd.f32 %v255, %v282
  %v391 = vadd.f32 %v256, %v282
  %v392 = vadd.f32 %v257, %v282
  %v393 = vadd.f32 %v258, %v282
  %v394 = vadd.f32 %v259, %v282
  %v395 = vadd.f32 %v260, %v282
  %v396 = vadd.f32 %v261, %v282
  %v397 = vadd.f32 %v262, %v282
  %v398 = vadd.f32 %v263, %v282
  %v399 = vadd.f32 %v264, %v282
  %v400 = vadd.f32 %v265, %v282
  %v401 = vadd.f32 %v266, %v282
  %v402 = vadd.f32 %v267, %v282
  %v403 = vadd.f32 %v268, %v282
  %v404 = vadd.f32 %v269, %v282
  %v405 = vadd.f32 %v270, %v282
  %v406 = vadd.f32 %v271, %v282
  %v407 = vadd.f32 %v272, %v282
  %v408 = vadd.f32 %v273, %v282
  %v409 = vadd.f32 %v274, %v282
  %v410 = vadd.f32 %v275, %v282
  %v411 = vadd.f32 %v276, %v282
  %vm412 = vcmask 64512
  %413 = vst.msk [vmem:[%s3] sm:$0xff] %vm412, %v284
  %414 = vst.msk [vmem:[%s3 + $0x8] sm:$0xff] %vm412, %v285
  %415 = vst.msk [vmem:[%s3 + $0x10] sm:$0xff] %vm412, %v286
  %416 = vst.msk [vmem:[%s3 + $0x18] sm:$0xff] %vm412, %v287
  %417 = vst.msk [vmem:[%s3 + $0x20] sm:$0xff] %vm412, %v288
  %418 = vst.msk [vmem:[%s3 + $0x28] sm:$0xff] %vm412, %v289
  %419 = vst.msk [vmem:[%s3 + $0x30] sm:$0xff] %vm412, %v290
  %420 = vst.msk [vmem:[%s3 + $0x38] sm:$0xff] %vm412, %v291
  %421 = vst.msk [vmem:[%s3 + $0x40] sm:$0xff] %vm412, %v292
  %422 = vst.msk [vmem:[%s3 + $0x48] sm:$0xff] %vm412, %v293
  %423 = vst.msk [vmem:[%s3 + $0x50] sm:$0xff] %vm412, %v294
  %424 = vst.msk [vmem:[%s3 + $0x58] sm:$0xff] %vm412, %v295
  %425 = vst.msk [vmem:[%s3 + $0x60] sm:$0xff] %vm412, %v296
  %426 = vst.msk [vmem:[%s3 + $0x68] sm:$0xff] %vm412, %v297
  %427 = vst.msk [vmem:[%s3 + $0x70] sm:$0xff] %vm412, %v298
  %428 = vst.msk [vmem:[%s3 + $0x78] sm:$0xff] %vm412, %v299
  %429 = vst.msk [vmem:[%s3 + $0x80] sm:$0xff] %vm412, %v300
  %430 = vst.msk [vmem:[%s3 + $0x88] sm:$0xff] %vm412, %v301
  %431 = vst.msk [vmem:[%s3 + $0x90] sm:$0xff] %vm412, %v302
  %432 = vst.msk [vmem:[%s3 + $0x98] sm:$0xff] %vm412, %v303
  %433 = vst.msk [vmem:[%s3 + $0xa0] sm:$0xff] %vm412, %v304
  %434 = vst.msk [vmem:[%s3 + $0xa8] sm:$0xff] %vm412, %v305
  %435 = vst.msk [vmem:[%s3 + $0xb0] sm:$0xff] %vm412, %v306
  %436 = vst.msk [vmem:[%s3 + $0xb8] sm:$0xff] %vm412, %v307
  %437 = vst.msk [vmem:[%s3 + $0xc0] sm:$0xff] %vm412, %v308
  %438 = vst.msk [vmem:[%s3 + $0xc8] sm:$0xff] %vm412, %v309
  %439 = vst.msk [vmem:[%s3 + $0xd0] sm:$0xff] %vm412, %v310
  %440 = vst.msk [vmem:[%s3 + $0xd8] sm:$0xff] %vm412, %v311
  %441 = vst.msk [vmem:[%s3 + $0xe0] sm:$0xff] %vm412, %v312
  %442 = vst.msk [vmem:[%s3 + $0xe8] sm:$0xff] %vm412, %v313
  %443 = vst.msk [vmem:[%s3 + $0xf0] sm:$0xff] %vm412, %v314
  %444 = vst.msk [vmem:[%s3 + $0xf8] sm:$0xff] %vm412, %v315
  %445 = vst.msk [vmem:[%s3 + $0x100] sm:$0xff] %vm412, %v316
  %446 = vst.msk [vmem:[%s3 + $0x108] sm:$0xff] %vm412, %v317
  %447 = vst.msk [vmem:[%s3 + $0x110] sm:$0xff] %vm412, %v318
  %448 = vst.msk [vmem:[%s3 + $0x118] sm:$0xff] %vm412, %v319
  %449 = vst.msk [vmem:[%s3 + $0x120] sm:$0xff] %vm412, %v320
  %450 = vst.msk [vmem:[%s3 + $0x128] sm:$0xff] %vm412, %v321
  %451 = vst.msk [vmem:[%s3 + $0x130] sm:$0xff] %vm412, %v322
  %452 = vst.msk [vmem:[%s3 + $0x138] sm:$0xff] %vm412, %v323
  %453 = vst.msk [vmem:[%s3 + $0x140] sm:$0xff] %vm412, %v324
  %454 = vst.msk [vmem:[%s3 + $0x148] sm:$0xff] %vm412, %v325
  %455 = vst.msk [vmem:[%s3 + $0x150] sm:$0xff] %vm412, %v326
  %456 = vst.msk [vmem:[%s3 + $0x158] sm:$0xff] %vm412, %v327
  %457 = vst.msk [vmem:[%s3 + $0x160] sm:$0xff] %vm412, %v328
  %458 = vst.msk [vmem:[%s3 + $0x168] sm:$0xff] %vm412, %v329
  %459 = vst.msk [vmem:[%s3 + $0x170] sm:$0xff] %vm412, %v330
  %460 = vst.msk [vmem:[%s3 + $0x178] sm:$0xff] %vm412, %v331
  %461 = vst.msk [vmem:[%s3 + $0x180] sm:$0xff] %vm412, %v332
  %462 = vst.msk [vmem:[%s3 + $0x188] sm:$0xff] %vm412, %v333
  %463 = vst.msk [vmem:[%s3 + $0x190] sm:$0xff] %vm412, %v334
  %464 = vst.msk [vmem:[%s3 + $0x198] sm:$0xff] %vm412, %v335
  %465 = vst.msk [vmem:[%s3 + $0x1a0] sm:$0xff] %vm412, %v336
  %466 = vst.msk [vmem:[%s3 + $0x1a8] sm:$0xff] %vm412, %v337
  %467 = vst.msk [vmem:[%s3 + $0x1b0] sm:$0xff] %vm412, %v338
  %468 = vst.msk [vmem:[%s3 + $0x1b8] sm:$0xff] %vm412, %v339
  %469 = vst.msk [vmem:[%s3 + $0x1c0] sm:$0xff] %vm412, %v340
  %470 = vst.msk [vmem:[%s3 + $0x1c8] sm:$0xff] %vm412, %v341
  %471 = vst.msk [vmem:[%s3 + $0x1d0] sm:$0xff] %vm412, %v342
  %472 = vst.msk [vmem:[%s3 + $0x1d8] sm:$0xff] %vm412, %v343
  %473 = vst.msk [vmem:[%s3 + $0x1e0] sm:$0xff] %vm412, %v344
  %474 = vst.msk [vmem:[%s3 + $0x1e8] sm:$0xff] %vm412, %v345
  %475 = vst.msk [vmem:[%s3 + $0x1f0] sm:$0xff] %vm412, %v346
  %476 = vst.msk [vmem:[%s3 + $0x1f8] sm:$0xff] %vm412, %v347
  %477 = vst.msk [vmem:[%s3 + $0x200] sm:$0xff] %vm412, %v348
  %478 = vst.msk [vmem:[%s3 + $0x208] sm:$0xff] %vm412, %v349
  %479 = vst.msk [vmem:[%s3 + $0x210] sm:$0xff] %vm412, %v350
  %480 = vst.msk [vmem:[%s3 + $0x218] sm:$0xff] %vm412, %v351
  %481 = vst.msk [vmem:[%s3 + $0x220] sm:$0xff] %vm412, %v352
  %482 = vst.msk [vmem:[%s3 + $0x228] sm:$0xff] %vm412, %v353
  %483 = vst.msk [vmem:[%s3 + $0x230] sm:$0xff] %vm412, %v354
  %484 = vst.msk [vmem:[%s3 + $0x238] sm:$0xff] %vm412, %v355
  %485 = vst.msk [vmem:[%s3 + $0x240] sm:$0xff] %vm412, %v356
  %486 = vst.msk [vmem:[%s3 + $0x248] sm:$0xff] %vm412, %v357
  %487 = vst.msk [vmem:[%s3 + $0x250] sm:$0xff] %vm412, %v358
  %488 = vst.msk [vmem:[%s3 + $0x258] sm:$0xff] %vm412, %v359
  %489 = vst.msk [vmem:[%s3 + $0x260] sm:$0xff] %vm412, %v360
  %490 = vst.msk [vmem:[%s3 + $0x268] sm:$0xff] %vm412, %v361
  %491 = vst.msk [vmem:[%s3 + $0x270] sm:$0xff] %vm412, %v362
  %492 = vst.msk [vmem:[%s3 + $0x278] sm:$0xff] %vm412, %v363
  %493 = vst.msk [vmem:[%s3 + $0x280] sm:$0xff] %vm412, %v364
  %494 = vst.msk [vmem:[%s3 + $0x288] sm:$0xff] %vm412, %v365
  %495 = vst.msk [vmem:[%s3 + $0x290] sm:$0xff] %vm412, %v366
  %496 = vst.msk [vmem:[%s3 + $0x298] sm:$0xff] %vm412, %v367
  %497 = vst.msk [vmem:[%s3 + $0x2a0] sm:$0xff] %vm412, %v368
  %498 = vst.msk [vmem:[%s3 + $0x2a8] sm:$0xff] %vm412, %v369
  %499 = vst.msk [vmem:[%s3 + $0x2b0] sm:$0xff] %vm412, %v370
  %500 = vst.msk [vmem:[%s3 + $0x2b8] sm:$0xff] %vm412, %v371
  %501 = vst.msk [vmem:[%s3 + $0x2c0] sm:$0xff] %vm412, %v372
  %502 = vst.msk [vmem:[%s3 + $0x2c8] sm:$0xff] %vm412, %v373
  %503 = vst.msk [vmem:[%s3 + $0x2d0] sm:$0xff] %vm412, %v374
  %504 = vst.msk [vmem:[%s3 + $0x2d8] sm:$0xff] %vm412, %v375
  %505 = vst.msk [vmem:[%s3 + $0x2e0] sm:$0xff] %vm412, %v376
  %506 = vst.msk [vmem:[%s3 + $0x2e8] sm:$0xff] %vm412, %v377
  %507 = vst.msk [vmem:[%s3 + $0x2f0] sm:$0xff] %vm412, %v378
  %508 = vst.msk [vmem:[%s3 + $0x2f8] sm:$0xff] %vm412, %v379
  %509 = vst.msk [vmem:[%s3 + $0x300] sm:$0xff] %vm412, %v380
  %510 = vst.msk [vmem:[%s3 + $0x308] sm:$0xff] %vm412, %v381
  %511 = vst.msk [vmem:[%s3 + $0x310] sm:$0xff] %vm412, %v382
  %512 = vst.msk [vmem:[%s3 + $0x318] sm:$0xff] %vm412, %v383
  %513 = vst.msk [vmem:[%s3 + $0x320] sm:$0xff] %vm412, %v384
  %514 = vst.msk [vmem:[%s3 + $0x328] sm:$0xff] %vm412, %v385
  %515 = vst.msk [vmem:[%s3 + $0x330] sm:$0xff] %vm412, %v386
  %516 = vst.msk [vmem:[%s3 + $0x338] sm:$0xff] %vm412, %v387
  %517 = vst.msk [vmem:[%s3 + $0x340] sm:$0xff] %vm412, %v388
  %518 = vst.msk [vmem:[%s3 + $0x348] sm:$0xff] %vm412, %v389
  %519 = vst.msk [vmem:[%s3 + $0x350] sm:$0xff] %vm412, %v390
  %520 = vst.msk [vmem:[%s3 + $0x358] sm:$0xff] %vm412, %v391
  %521 = vst.msk [vmem:[%s3 + $0x360] sm:$0xff] %vm412, %v392
  %522 = vst.msk [vmem:[%s3 + $0x368] sm:$0xff] %vm412, %v393
  %523 = vst.msk [vmem:[%s3 + $0x370] sm:$0xff] %vm412, %v394
  %524 = vst.msk [vmem:[%s3 + $0x378] sm:$0xff] %vm412, %v395
  %525 = vst.msk [vmem:[%s3 + $0x380] sm:$0xff] %vm412, %v396
  %526 = vst.msk [vmem:[%s3 + $0x388] sm:$0xff] %vm412, %v397
  %527 = vst.msk [vmem:[%s3 + $0x390] sm:$0xff] %vm412, %v398
  %528 = vst.msk [vmem:[%s3 + $0x398] sm:$0xff] %vm412, %v399
  %529 = vst.msk [vmem:[%s3 + $0x3a0] sm:$0xff] %vm412, %v400
  %530 = vst.msk [vmem:[%s3 + $0x3a8] sm:$0xff] %vm412, %v401
  %531 = vst.msk [vmem:[%s3 + $0x3b0] sm:$0xff] %vm412, %v402
  %532 = vst.msk [vmem:[%s3 + $0x3b8] sm:$0xff] %vm412, %v403
  %533 = vst.msk [vmem:[%s3 + $0x3c0] sm:$0xff] %vm412, %v404
  %534 = vst.msk [vmem:[%s3 + $0x3c8] sm:$0xff] %vm412, %v405
  %535 = vst.msk [vmem:[%s3 + $0x3d0] sm:$0xff] %vm412, %v406
  %536 = vst.msk [vmem:[%s3 + $0x3d8] sm:$0xff] %vm412, %v407
  %537 = vst.msk [vmem:[%s3 + $0x3e0] sm:$0xff] %vm412, %v408
  %538 = vst.msk [vmem:[%s3 + $0x3e8] sm:$0xff] %vm412, %v409
  %539 = vst.msk [vmem:[%s3 + $0x3f0] sm:$0xff] %vm412, %v410
  %540 = vst.msk [vmem:[%s3 + $0x3f8] sm:$0xff] %vm412, %v411
  // Predicated region
  $region14: #{residual_path.3} parent=0 // pred_check
    _
  $region15: #{residual_path.3} parent=0 // pred_check_branch
    %542 = sbr.rel (0) target = $region17
  $region16: #{residual_path.3} parent=0 // pred_region
    _
  $region17: #{residual_path.3} parent=0 // pred_fallthru
    _
  // Predicated region
  $region18: #{residual_path.3} parent=0 // pred_check
    _
  $region19: #{residual_path.3} parent=0 // pred_check_branch
    %544 = sbr.rel (0) target = $region21
  $region20: #{residual_path.3} parent=0 // pred_region
    _
  $region21: #{residual_path.3} parent=0 // pred_fallthru
    _

</llo_original>
